<compile_context>
chip_gen: v7x
topology: tpu7x:2x2x1
jax: 0.10.0
libtpu: 0.0.40
codegen_flags: <defaults>
</compile_context>

<pallas_src>
import functools

import jax
import jax.numpy as jnp
from jax import lax
from jax.experimental import pallas as pl
from jax.experimental.pallas import tpu as pltpu


def _csa_kernel(rgb_ref, ev_ref, masks_ref, w1_ref, b1_ref, w2t_ref, b2_ref,
                wrgb_ref, wev_ref, bsp_ref, out_rgb_ref, out_ev_ref,
                *, C, img_w, hw_real, neg_slope, padded):
    rgb = rgb_ref[...].astype(jnp.float32)            # (Bt, C, HWp)
    ev = ev_ref[...].astype(jnp.float32)              # (Bt, C, HWp)
    Bt = rgb.shape[0]
    HWp = rgb.shape[2]
    masks = masks_ref[...]                            # (10, HWp): 9 tap masks + -inf row

    # ---- channel pooling (AdaptiveAvg/MaxPool2d(1)) along the lane axis ----
    inv_hw = jnp.float32(1.0 / hw_real)
    avg_rgb = jnp.sum(rgb, axis=2, keepdims=True) * inv_hw       # (Bt, C, 1)
    avg_ev = jnp.sum(ev, axis=2, keepdims=True) * inv_hw
    if padded:
        ninf = masks[9:10, :]                          # 0 on real lanes, -1e30 on pad
        max_rgb = jnp.max(rgb + ninf, axis=2, keepdims=True)
        max_ev = jnp.max(ev + ninf, axis=2, keepdims=True)
    else:
        max_rgb = jnp.max(rgb, axis=2, keepdims=True)
        max_ev = jnp.max(ev, axis=2, keepdims=True)
    pooled = jnp.concatenate([avg_rgb, avg_ev, max_rgb, max_ev], axis=1)  # (Bt, 4C, 1)

    # ---- fused channel MLPs (avg & max branches share one pass) ----
    # layer 1: block-diagonal weights -> both hidden vectors at once (VPU + reduce).
    h = jnp.sum(pooled * w1_ref[...], axis=1, keepdims=True) + b1_ref[...]   # (Bt, 1, 2Cr)
    h = jnp.where(h >= 0, h, neg_slope * h)            # LeakyReLU(0.1)
    # layer 2: summed branch outputs + summed bias -> channel gate.
    cw = jax.nn.sigmoid(
        jnp.sum(h * w2t_ref[...], axis=2, keepdims=True) + b2_ref[...])      # (Bt, 2C, 1)

    rgb_s = rgb * cw[:, :C, :]                         # channel-gated streams
    ev_s = ev * cw[:, C:, :]

    # ---- 3x3 spatial conv (padding=1): channel reduction on the MXU ----
    # U[b, 2*t + cout, p] = sum_c Wrgb[2t+cout, c] * rgb_s[b,c,p] + (ev term)
    wrgb_b = jnp.broadcast_to(wrgb_ref[...], (Bt,) + tuple(wrgb_ref.shape))  # (Bt, 18, C)
    wev_b = jnp.broadcast_to(wev_ref[...], (Bt,) + tuple(wev_ref.shape))
    dn = (((2,), (1,)), ((0,), (0,)))                  # batched matmul over b, contract c
    U = (lax.dot_general(wrgb_b, rgb_s, dn, preferred_element_type=jnp.float32)
         + lax.dot_general(wev_b, ev_s, dn, preferred_element_type=jnp.float32))  # (Bt, 18, HWp)

    # Accumulate the 9 taps: lane-roll + border-mask 2-row slabs of U.
    acc = U[:, 8:10, :]                                # center tap (t=4): no roll / mask
    for t in range(9):
        if t == 4:
            continue
        k = (t // 3 - 1) * img_w + (t % 3 - 1)
        slab = pltpu.roll(U[:, 2 * t:2 * t + 2, :], (-k) % HWp, axis=2)
        acc = acc + slab * masks[t:t + 1, :]

    bsp = bsp_ref[...]                                 # (1, 2)
    sw0 = jax.nn.sigmoid(acc[:, 0:1, :] + bsp[0:1, 0:1])
    sw1 = jax.nn.sigmoid(acc[:, 1:2, :] + bsp[0:1, 1:2])

    out_rgb_ref[...] = (rgb_s * sw0).astype(out_rgb_ref.dtype)
    out_ev_ref[...] = (ev_s * sw1).astype(out_ev_ref.dtype)


def _vmem_capacity_bytes():
    try:
        info = pltpu.get_tpu_info()
        for name in ("vmem_capacity_bytes", "vmem_bytes", "vmem_size_bytes"):
            v = getattr(info, name, None)
            if v:
                return int(v)
    except Exception:
        pass
    return 64 * 1024 * 1024  # conservative default (v7x-sized VMEM)


def _auto_block_b(B, C, HWp, itemsize, block_budget_bytes):
    """Largest batch tile that fits the budget while keeping >=2 grid steps."""
    best = 1
    for bt in range(1, B + 1):
        if B % bt:
            continue
        io = 4 * bt * C * HWp * itemsize * 2                # 2 in + 2 out, double-buffered
        interm = bt * HWp * 4 * (4 * C + 18 + 8)            # gated streams, U, slabs, acc/sw
        if io + interm > block_budget_bytes:
            continue
        if B // bt >= 2 or B == 1:
            best = bt
    return best


def channel_spatial_attention(feat_rgb, feat_ev, params, *, block_b=None,
                              donate_inputs=False):
    """NCHW in, NCHW out (matching the PyTorch module's forward)."""
    B, C, H, W = feat_rgb.shape
    assert feat_ev.shape == (B, C, H, W)
    HW = H * W
    HWp = ((HW + 127) // 128) * 128                     # lane-dense output path
    pad = HWp - HW
    twoC = 2 * C

    w1a, b1a, w2a, b2a, w1m, b1m, w2m, b2m, ws, bs = params
    Cr = w1a.shape[1]

    # ---- pack the ten tiny parameter tensors into eight kernel operands ----
    w1 = jnp.zeros((2 * twoC, 2 * Cr), jnp.float32)     # block-diag layer-1 (avg | max)
    w1 = w1.at[:twoC, :Cr].set(w1a).at[twoC:, Cr:].set(w1m)
    b1 = jnp.concatenate([b1a, b1m], axis=1)            # (1, 2Cr)
    w2t = jnp.concatenate([w2a, w2m], axis=0).T         # (2C, 2Cr)
    b2 = (b2a + b2m).reshape(twoC, 1)                   # (2C, 1)
    wsp = jnp.transpose(ws, (0, 2, 1)).reshape(18, twoC)  # row = 2*tap + cout
    wrgb = wsp[:, :C]                                   # (18, C)
    wev = wsp[:, C:]                                    # (18, C)
    bsp = bs.reshape(1, 2).astype(jnp.float32)          # (1, 2)

    # ---- border-validity masks for the 9 taps (+ -inf lane-pad row) ----
    hh = jnp.arange(H, dtype=jnp.int32)[:, None]
    ww = jnp.arange(W, dtype=jnp.int32)[None, :]
    rows = []
    for ky in range(3):
        for kx in range(3):
            dy, dx = ky - 1, kx - 1
            valid = ((hh + dy >= 0) & (hh + dy < H) &
                     (ww + dx >= 0) & (ww + dx < W))
            rows.append(valid.reshape(1, HW).astype(jnp.float32))
    masks = jnp.concatenate(rows, axis=0)               # (9, HW)
    if pad:
        masks = jnp.pad(masks, ((0, 0), (0, pad)))
        ninf_row = jnp.concatenate(
            [jnp.zeros((1, HW), jnp.float32),
             jnp.full((1, pad), -1e30, jnp.float32)], axis=1)
    else:
        ninf_row = jnp.zeros((1, HWp), jnp.float32)
    masks = jnp.concatenate([masks, ninf_row], axis=0)  # (10, HWp)

    # ---- lane-dense feature layout (contiguous reshape + optional lane pad) ----
    rgb = feat_rgb.reshape(B, C, HW)
    ev = feat_ev.reshape(B, C, HW)
    if pad:
        rgb = jnp.pad(rgb, ((0, 0), (0, 0), (0, pad)))
        ev = jnp.pad(ev, ((0, 0), (0, 0), (0, pad)))

    # ---- generation-aware block_b: amortize per-step overhead, keep >=2 steps ----
    itemsize = jnp.dtype(feat_rgb.dtype).itemsize
    vmem_cap = _vmem_capacity_bytes()
    vmem_limit = int(min(vmem_cap * 3 // 4, 100 * 1024 * 1024))
    if block_b is None:
        block_b = _auto_block_b(B, C, HWp, itemsize, vmem_limit // 3)
    assert B % block_b == 0, "block_b must divide the batch size"
    Bt = block_b

    feat_spec = pl.BlockSpec((Bt, C, HWp), lambda b: (b, 0, 0))

    def vmem_full(arr):
        n = arr.ndim
        return pl.BlockSpec(tuple(arr.shape), lambda b, n=n: (0,) * n)

    kernel = functools.partial(
        _csa_kernel, C=C, img_w=W, hw_real=HW, neg_slope=0.1, padded=bool(pad))

    grid_spec = pltpu.PrefetchScalarGridSpec(
        num_scalar_prefetch=0,
        grid=(B // Bt,),
        in_specs=[feat_spec, feat_spec,
                  vmem_full(masks), vmem_full(w1), vmem_full(b1),
                  vmem_full(w2t), vmem_full(b2),
                  vmem_full(wrgb), vmem_full(wev), vmem_full(bsp)],
        out_specs=[feat_spec, feat_spec],
    )

    out_rgb, out_ev = pl.pallas_call(
        kernel,
        out_shape=(jax.ShapeDtypeStruct((B, C, HWp), feat_rgb.dtype),
                   jax.ShapeDtypeStruct((B, C, HWp), feat_ev.dtype)),
        grid_spec=grid_spec,
        compiler_params=pltpu.CompilerParams(
            dimension_semantics=("parallel",),
            vmem_limit_bytes=vmem_limit),
        input_output_aliases={0: 0, 1: 1} if donate_inputs else {},
    )(rgb, ev, masks, w1, b1, w2t, b2, wrgb, wev, bsp)

    if pad:
        out_rgb = out_rgb[..., :HW]
        out_ev = out_ev[..., :HW]
    return out_rgb.reshape(B, C, H, W), out_ev.reshape(B, C, H, W)


def reference(feat_rgb, feat_ev, params, C):
    """Plain-JAX reference mirroring the PyTorch forward (NCHW)."""
    w1a, b1a, w2a, b2a, w1m, b1m, w2m, b2m, ws, bs = params
    cat = jnp.concatenate([feat_rgb, feat_ev], axis=1)          # (B, 2C, H, W)
    avg = jnp.mean(cat, axis=(2, 3))                            # (B, 2C)
    mx = jnp.max(cat, axis=(2, 3))                              # (B, 2C)

    def mlp(v, w1, b1, w2, b2):
        h = v @ w1 + b1
        h = jnp.where(h >= 0, h, 0.1 * h)
        return h @ w2 + b2

    cw = jax.nn.sigmoid(mlp(avg, w1a, b1a, w2a, b2a) + mlp(mx, w1m, b1m, w2m, b2m))
    rgb_s = feat_rgb * cw[:, :C, None, None]
    ev_s = feat_ev * cw[:, C:, None, None]
    cat2 = jnp.concatenate([rgb_s, ev_s], axis=1)
    twoC = 2 * C
    w_conv = jnp.transpose(ws.reshape(3, 3, twoC, 2), (3, 2, 0, 1))  # OIHW
    sw = jax.lax.conv_general_dilated(cat2, w_conv, (1, 1), 'SAME',
                                      dimension_numbers=('NCHW', 'OIHW', 'NCHW'))
    sw = jax.nn.sigmoid(sw + bs.reshape(1, 2, 1, 1))
    return rgb_s * sw[:, 0:1], ev_s * sw[:, 1:2]


if __name__ == "__main__":
    B, C, H, W = 4, 16, 16, 16
    reduction = 16
    twoC = 2 * C
    Cr = twoC // reduction   # hidden width of the channel MLPs

    key = jax.random.PRNGKey(0)
    ks = jax.random.split(key, 12)

    # Deterministic synthetic parameters (shapes match the nn.Conv2d weights,
    # reshaped to matmul-friendly layouts).
    w1a = 0.1 * jax.random.normal(ks[0], (twoC, Cr), jnp.float32)   # conv1 avg (1x1)
    b1a = 0.1 * jax.random.normal(ks[1], (1, Cr), jnp.float32)
    w2a = 0.1 * jax.random.normal(ks[2], (Cr, twoC), jnp.float32)   # conv2 avg (1x1)
    b2a = 0.1 * jax.random.normal(ks[3], (1, twoC), jnp.float32)
    w1m = 0.1 * jax.random.normal(ks[4], (twoC, Cr), jnp.float32)   # conv1 max (1x1)
    b1m = 0.1 * jax.random.normal(ks[5], (1, Cr), jnp.float32)
    w2m = 0.1 * jax.random.normal(ks[6], (Cr, twoC), jnp.float32)   # conv2 max (1x1)
    b2m = 0.1 * jax.random.normal(ks[7], (1, twoC), jnp.float32)
    ws = 0.1 * jax.random.normal(ks[8], (9, twoC, 2), jnp.float32)  # 3x3 spatial conv
    bs = 0.1 * jax.random.normal(ks[9], (1, 2), jnp.float32)
    params = (w1a, b1a, w2a, b2a, w1m, b1m, w2m, b2m, ws, bs)

    feat_rgb = jax.random.normal(ks[10], (B, C, H, W), jnp.float32)
    feat_ev = jax.random.normal(ks[11], (B, C, H, W), jnp.float32)

    out_rgb, out_ev = channel_spatial_attention(feat_rgb, feat_ev, params)
    out_rgb = jax.block_until_ready(out_rgb)
    out_ev = jax.block_until_ready(out_ev)

    ref_rgb, ref_ev = reference(feat_rgb, feat_ev, params, C)
    assert jnp.allclose(out_rgb, ref_rgb, rtol=1e-3, atol=1e-4), "rgb mismatch"
    assert jnp.allclose(out_ev, ref_ev, rtol=1e-3, atol=1e-4), "ev mismatch"

    print("KERNEL_OK")
</pallas_src>

<mosaic_0001>
module attributes {stable_mosaic.version = 11 : i64} {
  func.func @_csa_kernel(%arg0: i32, %arg1: memref<2x16x256xf32, #tpu.memory_space<vmem>>, %arg2: memref<2x16x256xf32, #tpu.memory_space<vmem>>, %arg3: memref<10x256xf32, #tpu.memory_space<vmem>>, %arg4: memref<64x4xf32, #tpu.memory_space<vmem>>, %arg5: memref<1x4xf32, #tpu.memory_space<vmem>>, %arg6: memref<32x4xf32, #tpu.memory_space<vmem>>, %arg7: memref<32x1xf32, #tpu.memory_space<vmem>>, %arg8: memref<18x16xf32, #tpu.memory_space<vmem>>, %arg9: memref<18x16xf32, #tpu.memory_space<vmem>>, %arg10: memref<1x2xf32, #tpu.memory_space<vmem>>, %arg11: memref<2x16x256xf32, #tpu.memory_space<vmem>>, %arg12: memref<2x16x256xf32, #tpu.memory_space<vmem>>) attributes {dimension_semantics = [#tpu.dimension_semantics<parallel>], iteration_bounds = array<i64: 2>, scalar_prefetch = 0 : i64, scratch_operands = 0 : i64, tpu.core_type = #tpu.core_type<tc>, window_params = [{transform_indices = @transform_0, window_bounds = array<i64: 2, 16, 256>}, {transform_indices = @transform_1, window_bounds = array<i64: 2, 16, 256>}, {pipeline_mode = #tpu.pipeline_mode<synchronous>, transform_indices = @transform_2, window_bounds = array<i64: 10, 256>}, {pipeline_mode = #tpu.pipeline_mode<synchronous>, transform_indices = @transform_3, window_bounds = array<i64: 64, 4>}, {pipeline_mode = #tpu.pipeline_mode<synchronous>, transform_indices = @transform_4, window_bounds = array<i64: 1, 4>}, {pipeline_mode = #tpu.pipeline_mode<synchronous>, transform_indices = @transform_5, window_bounds = array<i64: 32, 4>}, {pipeline_mode = #tpu.pipeline_mode<synchronous>, transform_indices = @transform_6, window_bounds = array<i64: 32, 1>}, {pipeline_mode = #tpu.pipeline_mode<synchronous>, transform_indices = @transform_7, window_bounds = array<i64: 18, 16>}, {pipeline_mode = #tpu.pipeline_mode<synchronous>, transform_indices = @transform_8, window_bounds = array<i64: 18, 16>}, {pipeline_mode = #tpu.pipeline_mode<synchronous>, transform_indices = @transform_9, window_bounds = array<i64: 1, 2>}, {transform_indices = @transform_10, window_bounds = array<i64: 2, 16, 256>}, {transform_indices = @transform_11, window_bounds = array<i64: 2, 16, 256>}]} {
    %c0 = arith.constant 0 : index
    %c0_0 = arith.constant 0 : index
    %c0_1 = arith.constant 0 : index
    %0 = vector.load %arg1[%c0, %c0_0, %c0_1] : memref<2x16x256xf32, #tpu.memory_space<vmem>>, vector<2x16x256xf32>
    %c0_2 = arith.constant 0 : index
    %c0_3 = arith.constant 0 : index
    %c0_4 = arith.constant 0 : index
    %1 = vector.load %arg2[%c0_2, %c0_3, %c0_4] : memref<2x16x256xf32, #tpu.memory_space<vmem>>, vector<2x16x256xf32>
    %c0_5 = arith.constant 0 : index
    %c0_6 = arith.constant 0 : index
    %2 = vector.load %arg3[%c0_5, %c0_6] : memref<10x256xf32, #tpu.memory_space<vmem>>, vector<10x256xf32>
    %cst = arith.constant dense<0.000000e+00> : vector<2x16xf32>
    %3 = vector.multi_reduction <add>, %0, %cst [2] : vector<2x16x256xf32> to vector<2x16xf32>
    %4 = vector.shape_cast %3 : vector<2x16xf32> to vector<2x16x1xf32>
    %cst_7 = arith.constant 3.906250e-03 : f32
    %5 = vector.broadcast %cst_7 : f32 to vector<2x16x1xf32>
    %6 = arith.mulf %4, %5 : vector<2x16x1xf32>
    %cst_8 = arith.constant dense<0.000000e+00> : vector<2x16xf32>
    %7 = vector.multi_reduction <add>, %1, %cst_8 [2] : vector<2x16x256xf32> to vector<2x16xf32>
    %8 = vector.shape_cast %7 : vector<2x16xf32> to vector<2x16x1xf32>
    %cst_9 = arith.constant 3.906250e-03 : f32
    %9 = vector.broadcast %cst_9 : f32 to vector<2x16x1xf32>
    %10 = arith.mulf %8, %9 : vector<2x16x1xf32>
    %cst_10 = arith.constant dense<0xFF800000> : vector<2x16xf32>
    %11 = vector.multi_reduction <maximumf>, %0, %cst_10 [2] : vector<2x16x256xf32> to vector<2x16xf32>
    %12 = vector.shape_cast %11 : vector<2x16xf32> to vector<2x16x1xf32>
    %cst_11 = arith.constant dense<0xFF800000> : vector<2x16xf32>
    %13 = vector.multi_reduction <maximumf>, %1, %cst_11 [2] : vector<2x16x256xf32> to vector<2x16xf32>
    %14 = vector.shape_cast %13 : vector<2x16xf32> to vector<2x16x1xf32>
    %15 = tpu.concatenate %6, %10, %12, %14 in 1 : vector<2x16x1xf32>, vector<2x16x1xf32>, vector<2x16x1xf32>, vector<2x16x1xf32> -> vector<2x64x1xf32>
    %c0_12 = arith.constant 0 : index
    %c0_13 = arith.constant 0 : index
    %16 = vector.load %arg4[%c0_12, %c0_13] : memref<64x4xf32, #tpu.memory_space<vmem>>, vector<64x4xf32>
    %17 = vector.shape_cast %16 : vector<64x4xf32> to vector<1x64x4xf32>
    %18 = vector.broadcast %15 : vector<2x64x1xf32> to vector<2x64x4xf32>
    %19 = vector.broadcast %17 : vector<1x64x4xf32> to vector<2x64x4xf32>
    %20 = arith.mulf %18, %19 : vector<2x64x4xf32>
    %cst_14 = arith.constant dense<0.000000e+00> : vector<2x4xf32>
    %21 = vector.multi_reduction <add>, %20, %cst_14 [1] : vector<2x64x4xf32> to vector<2x4xf32>
    %22 = vector.shape_cast %21 : vector<2x4xf32> to vector<2x1x4xf32>
    %c0_15 = arith.constant 0 : index
    %c0_16 = arith.constant 0 : index
    %23 = vector.load %arg5[%c0_15, %c0_16] : memref<1x4xf32, #tpu.memory_space<vmem>>, vector<1x4xf32>
    %24 = vector.shape_cast %23 : vector<1x4xf32> to vector<1x1x4xf32>
    %25 = vector.broadcast %24 : vector<1x1x4xf32> to vector<2x1x4xf32>
    %26 = arith.addf %22, %25 : vector<2x1x4xf32>
    %cst_17 = arith.constant 0.000000e+00 : f32
    %27 = vector.broadcast %cst_17 : f32 to vector<2x1x4xf32>
    %28 = arith.cmpf oge, %26, %27 : vector<2x1x4xf32>
    %cst_18 = arith.constant 1.000000e-01 : f32
    %29 = vector.broadcast %cst_18 : f32 to vector<2x1x4xf32>
    %30 = arith.mulf %29, %26 : vector<2x1x4xf32>
    %31 = arith.select %28, %26, %30 : vector<2x1x4xi1>, vector<2x1x4xf32>
    %c0_19 = arith.constant 0 : index
    %c0_20 = arith.constant 0 : index
    %32 = vector.load %arg6[%c0_19, %c0_20] : memref<32x4xf32, #tpu.memory_space<vmem>>, vector<32x4xf32>
    %33 = vector.shape_cast %32 : vector<32x4xf32> to vector<1x32x4xf32>
    %34 = vector.broadcast %31 : vector<2x1x4xf32> to vector<2x32x4xf32>
    %35 = vector.broadcast %33 : vector<1x32x4xf32> to vector<2x32x4xf32>
    %36 = arith.mulf %34, %35 : vector<2x32x4xf32>
    %cst_21 = arith.constant dense<0.000000e+00> : vector<2x32xf32>
    %37 = vector.multi_reduction <add>, %36, %cst_21 [2] : vector<2x32x4xf32> to vector<2x32xf32>
    %38 = vector.shape_cast %37 : vector<2x32xf32> to vector<2x32x1xf32>
    %c0_22 = arith.constant 0 : index
    %c0_23 = arith.constant 0 : index
    %39 = vector.load %arg7[%c0_22, %c0_23] : memref<32x1xf32, #tpu.memory_space<vmem>>, vector<32x1xf32>
    %40 = vector.shape_cast %39 : vector<32x1xf32> to vector<1x32x1xf32>
    %41 = vector.broadcast %40 : vector<1x32x1xf32> to vector<2x32x1xf32>
    %42 = arith.addf %38, %41 : vector<2x32x1xf32>
    %43 = arith.negf %42 : vector<2x32x1xf32>
    %44 = math.exp %43 : vector<2x32x1xf32>
    %cst_24 = arith.constant 1.000000e+00 : f32
    %45 = vector.broadcast %cst_24 : f32 to vector<2x32x1xf32>
    %46 = arith.addf %45, %44 : vector<2x32x1xf32>
    %47 = arith.divf %45, %46 : vector<2x32x1xf32>
    %48 = vector.extract_strided_slice %47 {offsets = [0, 0, 0], sizes = [2, 16, 1], strides = [1, 1, 1]} : vector<2x32x1xf32> to vector<2x16x1xf32>
    %49 = vector.broadcast %48 : vector<2x16x1xf32> to vector<2x16x256xf32>
    %50 = arith.mulf %0, %49 : vector<2x16x256xf32>
    %51 = vector.extract_strided_slice %47 {offsets = [0, 16, 0], sizes = [2, 16, 1], strides = [1, 1, 1]} : vector<2x32x1xf32> to vector<2x16x1xf32>
    %52 = vector.broadcast %51 : vector<2x16x1xf32> to vector<2x16x256xf32>
    %53 = arith.mulf %1, %52 : vector<2x16x256xf32>
    %c0_25 = arith.constant 0 : index
    %c0_26 = arith.constant 0 : index
    %54 = vector.load %arg8[%c0_25, %c0_26] : memref<18x16xf32, #tpu.memory_space<vmem>>, vector<18x16xf32>
    %55 = vector.shape_cast %54 : vector<18x16xf32> to vector<1x18x16xf32>
    %56 = vector.broadcast %55 : vector<1x18x16xf32> to vector<2x18x16xf32>
    %c0_27 = arith.constant 0 : index
    %c0_28 = arith.constant 0 : index
    %57 = vector.load %arg9[%c0_27, %c0_28] : memref<18x16xf32, #tpu.memory_space<vmem>>, vector<18x16xf32>
    %58 = vector.shape_cast %57 : vector<18x16xf32> to vector<1x18x16xf32>
    %59 = vector.broadcast %58 : vector<1x18x16xf32> to vector<2x18x16xf32>
    %cst_29 = arith.constant dense<0.000000e+00> : vector<2x18x256xf32>
    %60 = tpu.matmul %56, %50, %cst_29 {dimension_numbers = #tpu.dot_dimension_numbers<[2], [1], [1], [2], [0, 0, 0, 1, 1, 2], [0], [0]>} : vector<2x18x16xf32>, vector<2x16x256xf32>, vector<2x18x256xf32> -> vector<2x18x256xf32>
    %cst_30 = arith.constant dense<0.000000e+00> : vector<2x18x256xf32>
    %61 = tpu.matmul %59, %53, %cst_30 {dimension_numbers = #tpu.dot_dimension_numbers<[2], [1], [1], [2], [0, 0, 0, 1, 1, 2], [0], [0]>} : vector<2x18x16xf32>, vector<2x16x256xf32>, vector<2x18x256xf32> -> vector<2x18x256xf32>
    %62 = arith.addf %60, %61 : vector<2x18x256xf32>
    %63 = vector.extract_strided_slice %62 {offsets = [0, 8, 0], sizes = [2, 2, 256], strides = [1, 1, 1]} : vector<2x18x256xf32> to vector<2x2x256xf32>
    %64 = vector.extract_strided_slice %62 {offsets = [0, 0, 0], sizes = [2, 2, 256], strides = [1, 1, 1]} : vector<2x18x256xf32> to vector<2x2x256xf32>
    %c17_i32 = arith.constant 17 : i32
    %65 = tpu.dynamic_rotate %64 by %c17_i32 dim 2 : vector<2x2x256xf32>, i32 -> vector<2x2x256xf32>
    %66 = vector.extract_strided_slice %2 {offsets = [0, 0], sizes = [1, 256], strides = [1, 1]} : vector<10x256xf32> to vector<1x256xf32>
    %67 = vector.shape_cast %66 : vector<1x256xf32> to vector<1x1x256xf32>
    %68 = vector.broadcast %67 : vector<1x1x256xf32> to vector<2x2x256xf32>
    %69 = arith.mulf %65, %68 : vector<2x2x256xf32>
    %70 = arith.addf %63, %69 : vector<2x2x256xf32>
    %71 = vector.extract_strided_slice %62 {offsets = [0, 2, 0], sizes = [2, 2, 256], strides = [1, 1, 1]} : vector<2x18x256xf32> to vector<2x2x256xf32>
    %c16_i32 = arith.constant 16 : i32
    %72 = tpu.dynamic_rotate %71 by %c16_i32 dim 2 : vector<2x2x256xf32>, i32 -> vector<2x2x256xf32>
    %73 = vector.extract_strided_slice %2 {offsets = [1, 0], sizes = [1, 256], strides = [1, 1]} : vector<10x256xf32> to vector<1x256xf32>
    %74 = vector.shape_cast %73 : vector<1x256xf32> to vector<1x1x256xf32>
    %75 = vector.broadcast %74 : vector<1x1x256xf32> to vector<2x2x256xf32>
    %76 = arith.mulf %72, %75 : vector<2x2x256xf32>
    %77 = arith.addf %70, %76 : vector<2x2x256xf32>
    %78 = vector.extract_strided_slice %62 {offsets = [0, 4, 0], sizes = [2, 2, 256], strides = [1, 1, 1]} : vector<2x18x256xf32> to vector<2x2x256xf32>
    %c15_i32 = arith.constant 15 : i32
    %79 = tpu.dynamic_rotate %78 by %c15_i32 dim 2 : vector<2x2x256xf32>, i32 -> vector<2x2x256xf32>
    %80 = vector.extract_strided_slice %2 {offsets = [2, 0], sizes = [1, 256], strides = [1, 1]} : vector<10x256xf32> to vector<1x256xf32>
    %81 = vector.shape_cast %80 : vector<1x256xf32> to vector<1x1x256xf32>
    %82 = vector.broadcast %81 : vector<1x1x256xf32> to vector<2x2x256xf32>
    %83 = arith.mulf %79, %82 : vector<2x2x256xf32>
    %84 = arith.addf %77, %83 : vector<2x2x256xf32>
    %85 = vector.extract_strided_slice %62 {offsets = [0, 6, 0], sizes = [2, 2, 256], strides = [1, 1, 1]} : vector<2x18x256xf32> to vector<2x2x256xf32>
    %c1_i32 = arith.constant 1 : i32
    %86 = tpu.dynamic_rotate %85 by %c1_i32 dim 2 : vector<2x2x256xf32>, i32 -> vector<2x2x256xf32>
    %87 = vector.extract_strided_slice %2 {offsets = [3, 0], sizes = [1, 256], strides = [1, 1]} : vector<10x256xf32> to vector<1x256xf32>
    %88 = vector.shape_cast %87 : vector<1x256xf32> to vector<1x1x256xf32>
    %89 = vector.broadcast %88 : vector<1x1x256xf32> to vector<2x2x256xf32>
    %90 = arith.mulf %86, %89 : vector<2x2x256xf32>
    %91 = arith.addf %84, %90 : vector<2x2x256xf32>
    %92 = vector.extract_strided_slice %62 {offsets = [0, 10, 0], sizes = [2, 2, 256], strides = [1, 1, 1]} : vector<2x18x256xf32> to vector<2x2x256xf32>
    %c255_i32 = arith.constant 255 : i32
    %93 = tpu.dynamic_rotate %92 by %c255_i32 dim 2 : vector<2x2x256xf32>, i32 -> vector<2x2x256xf32>
    %94 = vector.extract_strided_slice %2 {offsets = [5, 0], sizes = [1, 256], strides = [1, 1]} : vector<10x256xf32> to vector<1x256xf32>
    %95 = vector.shape_cast %94 : vector<1x256xf32> to vector<1x1x256xf32>
    %96 = vector.broadcast %95 : vector<1x1x256xf32> to vector<2x2x256xf32>
    %97 = arith.mulf %93, %96 : vector<2x2x256xf32>
    %98 = arith.addf %91, %97 : vector<2x2x256xf32>
    %99 = vector.extract_strided_slice %62 {offsets = [0, 12, 0], sizes = [2, 2, 256], strides = [1, 1, 1]} : vector<2x18x256xf32> to vector<2x2x256xf32>
    %c241_i32 = arith.constant 241 : i32
    %100 = tpu.dynamic_rotate %99 by %c241_i32 dim 2 : vector<2x2x256xf32>, i32 -> vector<2x2x256xf32>
    %101 = vector.extract_strided_slice %2 {offsets = [6, 0], sizes = [1, 256], strides = [1, 1]} : vector<10x256xf32> to vector<1x256xf32>
    %102 = vector.shape_cast %101 : vector<1x256xf32> to vector<1x1x256xf32>
    %103 = vector.broadcast %102 : vector<1x1x256xf32> to vector<2x2x256xf32>
    %104 = arith.mulf %100, %103 : vector<2x2x256xf32>
    %105 = arith.addf %98, %104 : vector<2x2x256xf32>
    %106 = vector.extract_strided_slice %62 {offsets = [0, 14, 0], sizes = [2, 2, 256], strides = [1, 1, 1]} : vector<2x18x256xf32> to vector<2x2x256xf32>
    %c240_i32 = arith.constant 240 : i32
    %107 = tpu.dynamic_rotate %106 by %c240_i32 dim 2 : vector<2x2x256xf32>, i32 -> vector<2x2x256xf32>
    %108 = vector.extract_strided_slice %2 {offsets = [7, 0], sizes = [1, 256], strides = [1, 1]} : vector<10x256xf32> to vector<1x256xf32>
    %109 = vector.shape_cast %108 : vector<1x256xf32> to vector<1x1x256xf32>
    %110 = vector.broadcast %109 : vector<1x1x256xf32> to vector<2x2x256xf32>
    %111 = arith.mulf %107, %110 : vector<2x2x256xf32>
    %112 = arith.addf %105, %111 : vector<2x2x256xf32>
    %113 = vector.extract_strided_slice %62 {offsets = [0, 16, 0], sizes = [2, 2, 256], strides = [1, 1, 1]} : vector<2x18x256xf32> to vector<2x2x256xf32>
    %c239_i32 = arith.constant 239 : i32
    %114 = tpu.dynamic_rotate %113 by %c239_i32 dim 2 : vector<2x2x256xf32>, i32 -> vector<2x2x256xf32>
    %115 = vector.extract_strided_slice %2 {offsets = [8, 0], sizes = [1, 256], strides = [1, 1]} : vector<10x256xf32> to vector<1x256xf32>
    %116 = vector.shape_cast %115 : vector<1x256xf32> to vector<1x1x256xf32>
    %117 = vector.broadcast %116 : vector<1x1x256xf32> to vector<2x2x256xf32>
    %118 = arith.mulf %114, %117 : vector<2x2x256xf32>
    %119 = arith.addf %112, %118 : vector<2x2x256xf32>
    %c0_31 = arith.constant 0 : index
    %c0_32 = arith.constant 0 : index
    %120 = vector.load %arg10[%c0_31, %c0_32] : memref<1x2xf32, #tpu.memory_space<vmem>>, vector<1x2xf32>
    %121 = vector.extract_strided_slice %119 {offsets = [0, 0, 0], sizes = [2, 1, 256], strides = [1, 1, 1]} : vector<2x2x256xf32> to vector<2x1x256xf32>
    %122 = vector.extract_strided_slice %120 {offsets = [0, 0], sizes = [1, 1], strides = [1, 1]} : vector<1x2xf32> to vector<1x1xf32>
    %123 = vector.shape_cast %122 : vector<1x1xf32> to vector<1x1x1xf32>
    %124 = vector.broadcast %123 : vector<1x1x1xf32> to vector<2x1x256xf32>
    %125 = arith.addf %121, %124 : vector<2x1x256xf32>
    %126 = arith.negf %125 : vector<2x1x256xf32>
    %127 = math.exp %126 : vector<2x1x256xf32>
    %cst_33 = arith.constant 1.000000e+00 : f32
    %128 = vector.broadcast %cst_33 : f32 to vector<2x1x256xf32>
    %129 = arith.addf %128, %127 : vector<2x1x256xf32>
    %130 = arith.divf %128, %129 : vector<2x1x256xf32>
    %131 = vector.extract_strided_slice %119 {offsets = [0, 1, 0], sizes = [2, 1, 256], strides = [1, 1, 1]} : vector<2x2x256xf32> to vector<2x1x256xf32>
    %132 = vector.extract_strided_slice %120 {offsets = [0, 1], sizes = [1, 1], strides = [1, 1]} : vector<1x2xf32> to vector<1x1xf32>
    %133 = vector.shape_cast %132 : vector<1x1xf32> to vector<1x1x1xf32>
    %134 = vector.broadcast %133 : vector<1x1x1xf32> to vector<2x1x256xf32>
    %135 = arith.addf %131, %134 : vector<2x1x256xf32>
    %136 = arith.negf %135 : vector<2x1x256xf32>
    %137 = math.exp %136 : vector<2x1x256xf32>
    %cst_34 = arith.constant 1.000000e+00 : f32
    %138 = vector.broadcast %cst_34 : f32 to vector<2x1x256xf32>
    %139 = arith.addf %138, %137 : vector<2x1x256xf32>
    %140 = arith.divf %138, %139 : vector<2x1x256xf32>
    %141 = vector.broadcast %130 : vector<2x1x256xf32> to vector<2x16x256xf32>
    %142 = arith.mulf %50, %141 : vector<2x16x256xf32>
    %c0_35 = arith.constant 0 : index
    %c0_36 = arith.constant 0 : index
    %c0_37 = arith.constant 0 : index
    %143 = vector.load %arg11[%c0_35, %c0_36, %c0_37] : memref<2x16x256xf32, #tpu.memory_space<vmem>>, vector<2x16x256xf32>
    tpu.vector_store %arg11[%c0_35, %c0_36, %c0_37], %142 {strides = array<i32>} : memref<2x16x256xf32, #tpu.memory_space<vmem>>, vector<2x16x256xf32>,
    %144 = vector.broadcast %140 : vector<2x1x256xf32> to vector<2x16x256xf32>
    %145 = arith.mulf %53, %144 : vector<2x16x256xf32>
    %c0_38 = arith.constant 0 : index
    %c0_39 = arith.constant 0 : index
    %c0_40 = arith.constant 0 : index
    %146 = vector.load %arg12[%c0_38, %c0_39, %c0_40] : memref<2x16x256xf32, #tpu.memory_space<vmem>>, vector<2x16x256xf32>
    tpu.vector_store %arg12[%c0_38, %c0_39, %c0_40], %145 {strides = array<i32>} : memref<2x16x256xf32, #tpu.memory_space<vmem>>, vector<2x16x256xf32>,
    return
  }
  func.func @transform_0(%arg0: i32) -> (i32, i32, i32) {
    %c0_i32 = arith.constant 0 : i32
    %c0_i32_0 = arith.constant 0 : i32
    %c0_i32_1 = arith.constant 0 : i32
    return %arg0, %c0_i32, %c0_i32_0 : i32, i32, i32
  }
  func.func @transform_1(%arg0: i32) -> (i32, i32, i32) {
    %c0_i32 = arith.constant 0 : i32
    %c0_i32_0 = arith.constant 0 : i32
    %c0_i32_1 = arith.constant 0 : i32
    return %arg0, %c0_i32, %c0_i32_0 : i32, i32, i32
  }
  func.func @transform_2(%arg0: i32) -> (i32, i32) {
    %c0_i32 = arith.constant 0 : i32
    %c0_i32_0 = arith.constant 0 : i32
    %c0_i32_1 = arith.constant 0 : i32
    return %c0_i32, %c0_i32_0 : i32, i32
  }
  func.func @transform_3(%arg0: i32) -> (i32, i32) {
    %c0_i32 = arith.constant 0 : i32
    %c0_i32_0 = arith.constant 0 : i32
    %c0_i32_1 = arith.constant 0 : i32
    return %c0_i32, %c0_i32_0 : i32, i32
  }
  func.func @transform_4(%arg0: i32) -> (i32, i32) {
    %c0_i32 = arith.constant 0 : i32
    %c0_i32_0 = arith.constant 0 : i32
    %c0_i32_1 = arith.constant 0 : i32
    return %c0_i32, %c0_i32_0 : i32, i32
  }
  func.func @transform_5(%arg0: i32) -> (i32, i32) {
    %c0_i32 = arith.constant 0 : i32
    %c0_i32_0 = arith.constant 0 : i32
    %c0_i32_1 = arith.constant 0 : i32
    return %c0_i32, %c0_i32_0 : i32, i32
  }
  func.func @transform_6(%arg0: i32) -> (i32, i32) {
    %c0_i32 = arith.constant 0 : i32
    %c0_i32_0 = arith.constant 0 : i32
    %c0_i32_1 = arith.constant 0 : i32
    return %c0_i32, %c0_i32_0 : i32, i32
  }
  func.func @transform_7(%arg0: i32) -> (i32, i32) {
    %c0_i32 = arith.constant 0 : i32
    %c0_i32_0 = arith.constant 0 : i32
    %c0_i32_1 = arith.constant 0 : i32
    return %c0_i32, %c0_i32_0 : i32, i32
  }
  func.func @transform_8(%arg0: i32) -> (i32, i32) {
    %c0_i32 = arith.constant 0 : i32
    %c0_i32_0 = arith.constant 0 : i32
    %c0_i32_1 = arith.constant 0 : i32
    return %c0_i32, %c0_i32_0 : i32, i32
  }
  func.func @transform_9(%arg0: i32) -> (i32, i32) {
    %c0_i32 = arith.constant 0 : i32
    %c0_i32_0 = arith.constant 0 : i32
    %c0_i32_1 = arith.constant 0 : i32
    return %c0_i32, %c0_i32_0 : i32, i32
  }
  func.func @transform_10(%arg0: i32) -> (i32, i32, i32) {
    %c0_i32 = arith.constant 0 : i32
    %c0_i32_0 = arith.constant 0 : i32
    %c0_i32_1 = arith.constant 0 : i32
    return %arg0, %c0_i32, %c0_i32_0 : i32, i32, i32
  }
  func.func @transform_11(%arg0: i32) -> (i32, i32, i32) {
    %c0_i32 = arith.constant 0 : i32
    %c0_i32_0 = arith.constant 0 : i32
    %c0_i32_1 = arith.constant 0 : i32
    return %arg0, %c0_i32, %c0_i32_0 : i32, i32, i32
  }
}

</mosaic_0001>

<llo_original>
// kernel: tpu_custom_call.1
$region0: #{tpu_custom_call.1}
  #allocation0 [shape = 'u32[]', space=smem, size = 0x4, offset = 0x4, fixed_abs, tag = 'smem constant byte address 0x4 - core index']
  #allocation1 [shape = 'u32[144,128]{1,0:T(1,128)}', space=vmem, size = 0x12000, scoped, tag = 'internal scratch']
  %s0 = inlined_call_operand.vmem [shape: f32[4,16,256], index: 0, kind: input, shape index: {}]
  %s1 = inlined_call_operand.hbm [shape: f32[4,16,256], index: 1, kind: input, shape index: {}]
  %s2 = inlined_call_operand.vmem [shape: f32[10,256], index: 2, kind: input, shape index: {}]
  %s3 = inlined_call_operand.vmem [shape: f32[64,4], index: 3, kind: input, shape index: {}]
  %s4 = inlined_call_operand.vmem [shape: f32[1,4], index: 4, kind: input, shape index: {}]
  %s5 = inlined_call_operand.vmem [shape: f32[32,4], index: 5, kind: input, shape index: {}]
  %s6 = inlined_call_operand.vmem [shape: f32[32,1], index: 6, kind: input, shape index: {}]
  %s7 = inlined_call_operand.vmem [shape: f32[18,16], index: 7, kind: input, shape index: {}]
  %s8 = inlined_call_operand.vmem [shape: f32[18,16], index: 8, kind: input, shape index: {}]
  %s9 = inlined_call_operand.vmem [shape: f32[1,2], index: 9, kind: input, shape index: {}]
  %s10 = inlined_call_operand.hbm [shape: f32[4,16,256], index: 10, kind: output, shape index: {0}]
  %s11 = inlined_call_operand.hbm [shape: f32[4,16,256], index: 11, kind: output, shape index: {1}]
  %12 = xla_tuple %s10, %s11
  %s13 = sld [smem:[#allocation0]]
  $region85: #{tpu_custom_call.1} parent=0
    _
  %s15 = ssub.s32 1, %s13
  %s16 = scalar_select 0, %s15, %s13
  $region1: #{tpu_custom_call.1} parent=0
    #allocation2 [shape = 'u8[65536]{0}', space=vmem, size = 0x10000, scoped, tag = 'input window, operand 1']
    #allocation3 [shape = 's32[2]{0}', space=sflag, size = 0x8, scoped, tag = 'scoped memory for tpu_custom_call.1']
    #allocation4 [shape = 's32[2]{0}', space=sflag, size = 0x8, scoped, tag = 'scoped memory for tpu_custom_call.1']
    #allocation5 [shape = 'u8[65536]{0}', space=vmem, size = 0x10000, scoped, tag = 'output window, operand 0']
    #allocation6 [shape = 'u8[65536]{0}', space=vmem, size = 0x10000, scoped, tag = 'output window, operand 1']
    #allocation7 [shape = 's32[2]{0}', space=sflag, size = 0x8, scoped, tag = 'scoped memory for tpu_custom_call.1']
    %17 = vsyncpa [#allocation3], 0
    %s18 = scalar_lea.sflag [#allocation3], 1
    %19 = vsyncpa %s18, 0
    %20 = vsyncpa [#allocation4], 0
    %s21 = scalar_lea.sflag [#allocation4], 1
    %22 = vsyncpa %s21, 0
    %23 = vsyncpa [#allocation7], 0
    %s24 = scalar_lea.sflag [#allocation7], 1
    %25 = vsyncpa %s24, 0
    loop: start=0, step=1, limit=4
    $region2: #{tpu_custom_call.1} parent=1 // loop_pre_header
      _
    $region3: #{tpu_custom_call.1} parent=1 // loop_header
      %s27 = sphi 0, %s31
      %p28 = scmp.ge.s32.totalorder %s27, 4
      %s37 = sphi 0, %s39
      %s40 = sphi 0, %s37
      %s41 = sphi 0, %s40
      %s57 = sphi 0, %s41
      %s63 = sphi 0, %s65
      %s66 = sphi 0, %s63
      %s67 = sphi 0, %s66
      %s83 = sphi 0, %s67
      %s87 = sphi 0, %s87
      %s89 = sphi 0, %s87
      %s90 = sphi 0, %s89
      %s104 = sphi 0, %s90
      %s108 = sphi 0, %s108
      %s110 = sphi 0, %s108
      %s111 = sphi 0, %s110
      %s125 = sphi 0, %s111
      %s129 = sphi 0, %s129
      %s131 = sphi 0, %s129
      %s132 = sphi 0, %s131
      %s146 = sphi 0, %s132
      %s150 = sphi 0, %s150
      %s152 = sphi 0, %s150
      %s153 = sphi 0, %s152
      %s167 = sphi 0, %s153
      %s171 = sphi 0, %s171
      %s173 = sphi 0, %s171
      %s174 = sphi 0, %s173
      %s188 = sphi 0, %s174
      %s192 = sphi 0, %s192
      %s194 = sphi 0, %s192
      %s195 = sphi 0, %s194
      %s209 = sphi 0, %s195
      %s213 = sphi 0, %s213
      %s215 = sphi 0, %s213
      %s216 = sphi 0, %s215
      %s230 = sphi 0, %s216
      %s234 = sphi 0, %s234
      %s236 = sphi 0, %s234
      %s237 = sphi 0, %s236
      %s251 = sphi 0, %s237
      %s257 = sphi 0, %s259
      %s260 = sphi 0, %s257
      %s261 = sphi 0, %s260
      %s277 = sphi 0, %s261
      %s283 = sphi 0, %s285
      %s286 = sphi 0, %s283
      %s287 = sphi 0, %s286
      %s303 = sphi 0, %s287
    $region4: #{tpu_custom_call.1} parent=1 // loop_header_branch
      %30 = sbr.rel (%p28) target = $region8
    $region5: #{tpu_custom_call.1} parent=1 // loop_body
      %s32 = ssub.s32 %s27, 1
      %s33 = ssub.s32 %s27, 2
      %s34 = sadd.s32 %s27, 1
      %s35 = ssub.s32 %s27, %s34
      %p36 = scmp.eq.s32.totalorder %s35, 0
      %s38 = sadd.s32 %s37, 1
      %s39 = scalar_select %p36, %s37, %s38
      %p42 = pneg %p36
      %p43 = scmp.eq.s32.totalorder %s27, 1
      %p44 = por %p42, %p43
      %p45 = scmp.ne.s32.totalorder %s37, %s40
      %p46 = scmp.eq.s32.totalorder %s27, 0
      %p47 = por %p45, %p46
      %p48 = scmp.ne.s32.totalorder %s37, %s40
      %p49 = scmp.eq.s32.totalorder %s32, 1
      %p50 = por %p48, %p49
      %p51 = scmp.ne.s32.totalorder %s40, %s41
      %p52 = scmp.eq.s32.totalorder %s32, 0
      %p53 = por %p51, %p52
      %p54 = scmp.ne.s32.totalorder %s40, %s41
      %p55 = scmp.eq.s32.totalorder %s33, 1
      %p56 = por %p54, %p55
      %p58 = scmp.ne.s32.totalorder %s41, %s57
      %p59 = scmp.eq.s32.totalorder %s33, 0
      %p60 = por %p58, %p59
      %s61 = ssub.s32 %s27, %s34
      %p62 = scmp.eq.s32.totalorder %s61, 0
      %s64 = sadd.s32 %s63, 1
      %s65 = scalar_select %p62, %s63, %s64
      %p68 = pneg %p62
      %p69 = scmp.eq.s32.totalorder %s27, 1
      %p70 = por %p68, %p69
      %p71 = scmp.ne.s32.totalorder %s63, %s66
      %p72 = scmp.eq.s32.totalorder %s27, 0
      %p73 = por %p71, %p72
      %p74 = scmp.ne.s32.totalorder %s63, %s66
      %p75 = scmp.eq.s32.totalorder %s32, 1
      %p76 = por %p74, %p75
      %p77 = scmp.ne.s32.totalorder %s66, %s67
      %p78 = scmp.eq.s32.totalorder %s32, 0
      %p79 = por %p77, %p78
      %p80 = scmp.ne.s32.totalorder %s66, %s67
      %p81 = scmp.eq.s32.totalorder %s33, 1
      %p82 = por %p80, %p81
      %p84 = scmp.ne.s32.totalorder %s67, %s83
      %p85 = scmp.eq.s32.totalorder %s33, 0
      %p86 = por %p84, %p85
      %s88 = sadd.s32 %s87, 1
      %p91 = scmp.eq.s32.totalorder %s27, 1
      %p92 = scmp.ne.s32.totalorder %s87, %s89
      %p93 = scmp.eq.s32.totalorder %s27, 0
      %p94 = por %p92, %p93
      %p95 = scmp.ne.s32.totalorder %s87, %s89
      %p96 = scmp.eq.s32.totalorder %s32, 1
      %p97 = por %p95, %p96
      %p98 = scmp.ne.s32.totalorder %s89, %s90
      %p99 = scmp.eq.s32.totalorder %s32, 0
      %p100 = por %p98, %p99
      %p101 = scmp.ne.s32.totalorder %s89, %s90
      %p102 = scmp.eq.s32.totalorder %s33, 1
      %p103 = por %p101, %p102
      %p105 = scmp.ne.s32.totalorder %s90, %s104
      %p106 = scmp.eq.s32.totalorder %s33, 0
      %p107 = por %p105, %p106
      %s109 = sadd.s32 %s108, 1
      %p112 = scmp.eq.s32.totalorder %s27, 1
      %p113 = scmp.ne.s32.totalorder %s108, %s110
      %p114 = scmp.eq.s32.totalorder %s27, 0
      %p115 = por %p113, %p114
      %p116 = scmp.ne.s32.totalorder %s108, %s110
      %p117 = scmp.eq.s32.totalorder %s32, 1
      %p118 = por %p116, %p117
      %p119 = scmp.ne.s32.totalorder %s110, %s111
      %p120 = scmp.eq.s32.totalorder %s32, 0
      %p121 = por %p119, %p120
      %p122 = scmp.ne.s32.totalorder %s110, %s111
      %p123 = scmp.eq.s32.totalorder %s33, 1
      %p124 = por %p122, %p123
      %p126 = scmp.ne.s32.totalorder %s111, %s125
      %p127 = scmp.eq.s32.totalorder %s33, 0
      %p128 = por %p126, %p127
      %s130 = sadd.s32 %s129, 1
      %p133 = scmp.eq.s32.totalorder %s27, 1
      %p134 = scmp.ne.s32.totalorder %s129, %s131
      %p135 = scmp.eq.s32.totalorder %s27, 0
      %p136 = por %p134, %p135
      %p137 = scmp.ne.s32.totalorder %s129, %s131
      %p138 = scmp.eq.s32.totalorder %s32, 1
      %p139 = por %p137, %p138
      %p140 = scmp.ne.s32.totalorder %s131, %s132
      %p141 = scmp.eq.s32.totalorder %s32, 0
      %p142 = por %p140, %p141
      %p143 = scmp.ne.s32.totalorder %s131, %s132
      %p144 = scmp.eq.s32.totalorder %s33, 1
      %p145 = por %p143, %p144
      %p147 = scmp.ne.s32.totalorder %s132, %s146
      %p148 = scmp.eq.s32.totalorder %s33, 0
      %p149 = por %p147, %p148
      %s151 = sadd.s32 %s150, 1
      %p154 = scmp.eq.s32.totalorder %s27, 1
      %p155 = scmp.ne.s32.totalorder %s150, %s152
      %p156 = scmp.eq.s32.totalorder %s27, 0
      %p157 = por %p155, %p156
      %p158 = scmp.ne.s32.totalorder %s150, %s152
      %p159 = scmp.eq.s32.totalorder %s32, 1
      %p160 = por %p158, %p159
      %p161 = scmp.ne.s32.totalorder %s152, %s153
      %p162 = scmp.eq.s32.totalorder %s32, 0
      %p163 = por %p161, %p162
      %p164 = scmp.ne.s32.totalorder %s152, %s153
      %p165 = scmp.eq.s32.totalorder %s33, 1
      %p166 = por %p164, %p165
      %p168 = scmp.ne.s32.totalorder %s153, %s167
      %p169 = scmp.eq.s32.totalorder %s33, 0
      %p170 = por %p168, %p169
      %s172 = sadd.s32 %s171, 1
      %p175 = scmp.eq.s32.totalorder %s27, 1
      %p176 = scmp.ne.s32.totalorder %s171, %s173
      %p177 = scmp.eq.s32.totalorder %s27, 0
      %p178 = por %p176, %p177
      %p179 = scmp.ne.s32.totalorder %s171, %s173
      %p180 = scmp.eq.s32.totalorder %s32, 1
      %p181 = por %p179, %p180
      %p182 = scmp.ne.s32.totalorder %s173, %s174
      %p183 = scmp.eq.s32.totalorder %s32, 0
      %p184 = por %p182, %p183
      %p185 = scmp.ne.s32.totalorder %s173, %s174
      %p186 = scmp.eq.s32.totalorder %s33, 1
      %p187 = por %p185, %p186
      %p189 = scmp.ne.s32.totalorder %s174, %s188
      %p190 = scmp.eq.s32.totalorder %s33, 0
      %p191 = por %p189, %p190
      %s193 = sadd.s32 %s192, 1
      %p196 = scmp.eq.s32.totalorder %s27, 1
      %p197 = scmp.ne.s32.totalorder %s192, %s194
      %p198 = scmp.eq.s32.totalorder %s27, 0
      %p199 = por %p197, %p198
      %p200 = scmp.ne.s32.totalorder %s192, %s194
      %p201 = scmp.eq.s32.totalorder %s32, 1
      %p202 = por %p200, %p201
      %p203 = scmp.ne.s32.totalorder %s194, %s195
      %p204 = scmp.eq.s32.totalorder %s32, 0
      %p205 = por %p203, %p204
      %p206 = scmp.ne.s32.totalorder %s194, %s195
      %p207 = scmp.eq.s32.totalorder %s33, 1
      %p208 = por %p206, %p207
      %p210 = scmp.ne.s32.totalorder %s195, %s209
      %p211 = scmp.eq.s32.totalorder %s33, 0
      %p212 = por %p210, %p211
      %s214 = sadd.s32 %s213, 1
      %p217 = scmp.eq.s32.totalorder %s27, 1
      %p218 = scmp.ne.s32.totalorder %s213, %s215
      %p219 = scmp.eq.s32.totalorder %s27, 0
      %p220 = por %p218, %p219
      %p221 = scmp.ne.s32.totalorder %s213, %s215
      %p222 = scmp.eq.s32.totalorder %s32, 1
      %p223 = por %p221, %p222
      %p224 = scmp.ne.s32.totalorder %s215, %s216
      %p225 = scmp.eq.s32.totalorder %s32, 0
      %p226 = por %p224, %p225
      %p227 = scmp.ne.s32.totalorder %s215, %s216
      %p228 = scmp.eq.s32.totalorder %s33, 1
      %p229 = por %p227, %p228
      %p231 = scmp.ne.s32.totalorder %s216, %s230
      %p232 = scmp.eq.s32.totalorder %s33, 0
      %p233 = por %p231, %p232
      %s235 = sadd.s32 %s234, 1
      %p238 = scmp.eq.s32.totalorder %s27, 1
      %p239 = scmp.ne.s32.totalorder %s234, %s236
      %p240 = scmp.eq.s32.totalorder %s27, 0
      %p241 = por %p239, %p240
      %p242 = scmp.ne.s32.totalorder %s234, %s236
      %p243 = scmp.eq.s32.totalorder %s32, 1
      %p244 = por %p242, %p243
      %p245 = scmp.ne.s32.totalorder %s236, %s237
      %p246 = scmp.eq.s32.totalorder %s32, 0
      %p247 = por %p245, %p246
      %p248 = scmp.ne.s32.totalorder %s236, %s237
      %p249 = scmp.eq.s32.totalorder %s33, 1
      %p250 = por %p248, %p249
      %p252 = scmp.ne.s32.totalorder %s237, %s251
      %p253 = scmp.eq.s32.totalorder %s33, 0
      %p254 = por %p252, %p253
      %s255 = ssub.s32 %s27, %s34
      %p256 = scmp.eq.s32.totalorder %s255, 0
      %s258 = sadd.s32 %s257, 1
      %s259 = scalar_select %p256, %s257, %s258
      %p262 = pneg %p256
      %p263 = scmp.eq.s32.totalorder %s27, 1
      %p264 = por %p262, %p263
      %p265 = scmp.ne.s32.totalorder %s257, %s260
      %p266 = scmp.eq.s32.totalorder %s27, 0
      %p267 = por %p265, %p266
      %p268 = scmp.ne.s32.totalorder %s257, %s260
      %p269 = scmp.eq.s32.totalorder %s32, 1
      %p270 = por %p268, %p269
      %p271 = scmp.ne.s32.totalorder %s260, %s261
      %p272 = scmp.eq.s32.totalorder %s32, 0
      %p273 = por %p271, %p272
      %p274 = scmp.ne.s32.totalorder %s260, %s261
      %p275 = scmp.eq.s32.totalorder %s33, 1
      %p276 = por %p274, %p275
      %p278 = scmp.ne.s32.totalorder %s261, %s277
      %p279 = scmp.eq.s32.totalorder %s33, 0
      %p280 = por %p278, %p279
      %s281 = ssub.s32 %s27, %s34
      %p282 = scmp.eq.s32.totalorder %s281, 0
      %s284 = sadd.s32 %s283, 1
      %s285 = scalar_select %p282, %s283, %s284
      %p288 = pneg %p282
      %p289 = scmp.eq.s32.totalorder %s27, 1
      %p290 = por %p288, %p289
      %p291 = scmp.ne.s32.totalorder %s283, %s286
      %p292 = scmp.eq.s32.totalorder %s27, 0
      %p293 = por %p291, %p292
      %p294 = scmp.ne.s32.totalorder %s283, %s286
      %p295 = scmp.eq.s32.totalorder %s32, 1
      %p296 = por %p294, %p295
      %p297 = scmp.ne.s32.totalorder %s286, %s287
      %p298 = scmp.eq.s32.totalorder %s32, 0
      %p299 = por %p297, %p298
      %p300 = scmp.ne.s32.totalorder %s286, %s287
      %p301 = scmp.eq.s32.totalorder %s33, 1
      %p302 = por %p300, %p301
      %p304 = scmp.ne.s32.totalorder %s287, %s303
      %p305 = scmp.eq.s32.totalorder %s33, 0
      %p306 = por %p304, %p305
      %p307 = scmp.le.s32.totalorder 1, %s27
      %p308 = scmp.lt.s32.totalorder %s27, 3
      %p309 = pnand %p307, %p308
      %p310 = pneg %p309
      // Predicated region
      $region9: #{tpu_custom_call.1} parent=5 // pred_check
        _
      $region10: #{tpu_custom_call.1} parent=5 // pred_check_branch
        %312 = sbr.rel (%p309) target = $region12
      $region11: #{tpu_custom_call.1} parent=5 // pred_region
        %s313 = ssub.s32 %s27, 1
        // Predicated region
        $region13: #{tpu_custom_call.1} parent=11 // pred_check
          %p314 = pneg %p100
        $region14: #{tpu_custom_call.1} parent=11 // pred_check_branch
          %316 = sbr.rel (%p314) target = $region16
        $region15: #{tpu_custom_call.1} parent=11 // pred_region
          _
        $region16: #{tpu_custom_call.1} parent=11 // pred_fallthru
          _
        // Predicated region
        $region17: #{tpu_custom_call.1} parent=11 // pred_check
          %p317 = pneg %p121
        $region18: #{tpu_custom_call.1} parent=11 // pred_check_branch
          %319 = sbr.rel (%p317) target = $region20
        $region19: #{tpu_custom_call.1} parent=11 // pred_region
          _
        $region20: #{tpu_custom_call.1} parent=11 // pred_fallthru
          _
        // Predicated region
        $region21: #{tpu_custom_call.1} parent=11 // pred_check
          %p320 = pneg %p142
        $region22: #{tpu_custom_call.1} parent=11 // pred_check_branch
          %322 = sbr.rel (%p320) target = $region24
        $region23: #{tpu_custom_call.1} parent=11 // pred_region
          _
        $region24: #{tpu_custom_call.1} parent=11 // pred_fallthru
          _
        // Predicated region
        $region25: #{tpu_custom_call.1} parent=11 // pred_check
          %p323 = pneg %p163
        $region26: #{tpu_custom_call.1} parent=11 // pred_check_branch
          %325 = sbr.rel (%p323) target = $region28
        $region27: #{tpu_custom_call.1} parent=11 // pred_region
          _
        $region28: #{tpu_custom_call.1} parent=11 // pred_fallthru
          _
        // Predicated region
        $region29: #{tpu_custom_call.1} parent=11 // pred_check
          %p326 = pneg %p184
        $region30: #{tpu_custom_call.1} parent=11 // pred_check_branch
          %328 = sbr.rel (%p326) target = $region32
        $region31: #{tpu_custom_call.1} parent=11 // pred_region
          _
        $region32: #{tpu_custom_call.1} parent=11 // pred_fallthru
          _
        // Predicated region
        $region33: #{tpu_custom_call.1} parent=11 // pred_check
          %p329 = pneg %p205
        $region34: #{tpu_custom_call.1} parent=11 // pred_check_branch
          %331 = sbr.rel (%p329) target = $region36
        $region35: #{tpu_custom_call.1} parent=11 // pred_region
          _
        $region36: #{tpu_custom_call.1} parent=11 // pred_fallthru
          _
        // Predicated region
        $region37: #{tpu_custom_call.1} parent=11 // pred_check
          %p332 = pneg %p226
        $region38: #{tpu_custom_call.1} parent=11 // pred_check_branch
          %334 = sbr.rel (%p332) target = $region40
        $region39: #{tpu_custom_call.1} parent=11 // pred_region
          _
        $region40: #{tpu_custom_call.1} parent=11 // pred_fallthru
          _
        // Predicated region
        $region41: #{tpu_custom_call.1} parent=11 // pred_check
          %p335 = pneg %p247
        $region42: #{tpu_custom_call.1} parent=11 // pred_check_branch
          %337 = sbr.rel (%p335) target = $region44
        $region43: #{tpu_custom_call.1} parent=11 // pred_region
          _
        $region44: #{tpu_custom_call.1} parent=11 // pred_fallthru
          _
      $region12: #{tpu_custom_call.1} parent=5 // pred_fallthru
        _
      %p338 = scmp.lt.s32.totalorder %s27, 2
      // Predicated region
      $region45: #{tpu_custom_call.1} parent=5 // pred_check
        %p339 = pneg %p338
      $region46: #{tpu_custom_call.1} parent=5 // pred_check_branch
        %341 = sbr.rel (%p339) target = $region48
      $region47: #{tpu_custom_call.1} parent=5 // pred_region
        // Predicated region
        $region49: #{tpu_custom_call.1} parent=47 // pred_check
          %p342 = pneg %p47
        $region50: #{tpu_custom_call.1} parent=47 // pred_check_branch
          %344 = sbr.rel (%p342) target = $region52
        $region51: #{tpu_custom_call.1} parent=47 // pred_region
          %s345 = smul.u32 2, %s27
          %p346 = scmp.lt.s32.totalorder %s345, 3
          %s347 = scalar_select %p346, %s345, 3
          %s348 = smul.addr %s347, 4
          %s349 = smul.addr %s348, 8
          %s350 = scalar_lea.vmem %s0, %s349
          %s351 = smul.u32 2, %s27
        $region52: #{tpu_custom_call.1} parent=47 // pred_fallthru
          _
        // Predicated region
        $region53: #{tpu_custom_call.1} parent=47 // pred_check
          %p352 = pneg %p73
        $region54: #{tpu_custom_call.1} parent=47 // pred_check_branch
          %354 = sbr.rel (%p352) target = $region56
        $region55: #{tpu_custom_call.1} parent=47 // pred_region
          %s355 = sand.u32 %s63, 1
          %s356 = scalar_lea.sflag [#allocation3], %s355
          %s357 = sand.u32 %s63, 1
          %s358 = smul.addr %s357, 64
          %s359 = scalar_lea.vmem [#allocation2], %s358
          %s360 = smul.u32 2, %s27
          %s362 = ssub.s32 1024, 1024
          %363 = vsyncadd %s356, %s362
          %s364 = smul.addr %s360, 4
          %s365 = smul.addr %s364, 128
          %s366 = scalar_lea.hbm %s1, %s365
          %s367 = sshll.u32 %s359, 4
          %s368 = int_to_ptr.vmem [resolvable:$true] %s367
          %373 = dma.hbm_to_vmem [thread:$0]  %s366, 1024, %s368, %s356, 256, 256, 16
        $region56: #{tpu_custom_call.1} parent=47 // pred_fallthru
          _
      $region48: #{tpu_custom_call.1} parent=5 // pred_fallthru
        _
      %p374 = scmp.le.s32.totalorder 1, %s27
      %p375 = scmp.lt.s32.totalorder %s27, 3
      %p376 = pnand %p374, %p375
      %p377 = pneg %p376
      // Predicated region
      $region57: #{tpu_custom_call.1} parent=5 // pred_check
        _
      $region58: #{tpu_custom_call.1} parent=5 // pred_check_branch
        %379 = sbr.rel (%p376) target = $region60
      $region59: #{tpu_custom_call.1} parent=5 // pred_region
        %s380 = ssub.s32 %s27, 1
        %s381 = sand.u32 %s66, 1
        %s382 = scalar_lea.sflag [#allocation3], %s381
        %s383 = sand.u32 %s66, 1
        %s384 = smul.addr %s383, 64
        %s385 = scalar_lea.vmem [#allocation2], %s384
        // Predicated region
        $region61: #{tpu_custom_call.1} parent=59 // pred_check
          %p386 = pneg %p79
        $region62: #{tpu_custom_call.1} parent=59 // pred_check_branch
          %388 = sbr.rel (%p386) target = $region64
        $region63: #{tpu_custom_call.1} parent=59 // pred_region
          %389 = dma.done %s382, 1024
        $region64: #{tpu_custom_call.1} parent=59 // pred_fallthru
          _
        %s390 = smul.u32 2, %s32
        %p391 = scmp.lt.s32.totalorder %s390, 3
        %s392 = scalar_select %p391, %s390, 3
        %s393 = smul.addr %s392, 4
        %s394 = smul.addr %s393, 8
        %s395 = scalar_lea.vmem %s0, %s394
        %p396 = pneg %p53
        %p397 = pneg %p50
        %s398 = sand.u32 %s66, 1
        %s399 = scalar_lea.sflag [#allocation3], %s398
        %s400 = sand.u32 %s66, 1
        %s401 = smul.addr %s400, 64
        %s402 = scalar_lea.vmem [#allocation2], %s401
        %p403 = pneg %p79
        %p404 = pneg %p76
        %p405 = pneg %p100
        %p406 = pneg %p97
        %p407 = pneg %p121
        %p408 = pneg %p118
        %p409 = pneg %p142
        %p410 = pneg %p139
        %p411 = pneg %p163
        %p412 = pneg %p160
        %p413 = pneg %p184
        %p414 = pneg %p181
        %p415 = pneg %p205
        %p416 = pneg %p202
        %p417 = pneg %p226
        %p418 = pneg %p223
        %p419 = pneg %p247
        %p420 = pneg %p244
        %p421 = pneg %p273
        %p422 = pneg %p270
        %s423 = sand.u32 %s260, 1
        %s424 = scalar_lea.sflag [#allocation4], %s423
        %s425 = sand.u32 %s260, 1
        %s426 = smul.addr %s425, 64
        %s427 = scalar_lea.vmem [#allocation5], %s426
        %p428 = pneg %p299
        %p429 = pneg %p296
        %s430 = sand.u32 %s286, 1
        %s431 = scalar_lea.sflag [#allocation7], %s430
        %s432 = sand.u32 %s286, 1
        %s433 = smul.addr %s432, 64
        %s434 = scalar_lea.vmem [#allocation6], %s433
        %s435 = smul.u32 2, %s32
        %p436 = scmp.lt.s32.totalorder %s435, 3
        %s437 = scalar_select %p436, %s435, 3
        %s438 = smul.addr %s437, 4
        %s439 = smul.addr %s438, 8
        %s440 = scalar_lea.vmem %s0, %s439
        %s441 = smul.u32 2, %s32
        %s442 = smul.u32 2, %s32
        %s443 = smul.u32 2, %s32
        %s444 = smul.u32 2, %s32
        %v445 = vld [vmem:[%s440] sm:$0xff]
        %v446 = vld [vmem:[%s440 + $0x8] sm:$0xff]
        %v447 = vld [vmem:[%s440 + $0x10] sm:$0xff]
        %v448 = vld [vmem:[%s440 + $0x18] sm:$0xff]
        %v449 = vld [vmem:[%s440 + $0x20] sm:$0xff]
        %v450 = vld [vmem:[%s440 + $0x28] sm:$0xff]
        %v451 = vld [vmem:[%s440 + $0x30] sm:$0xff]
        %v452 = vld [vmem:[%s440 + $0x38] sm:$0xff]
        %v453 = vld [vmem:[%s385] sm:$0xff]
        %v454 = vld [vmem:[%s385 + $0x8] sm:$0xff]
        %v455 = vld [vmem:[%s385 + $0x10] sm:$0xff]
        %v456 = vld [vmem:[%s385 + $0x18] sm:$0xff]
        %v457 = vld [vmem:[%s385 + $0x20] sm:$0xff]
        %v458 = vld [vmem:[%s385 + $0x28] sm:$0xff]
        %v459 = vld [vmem:[%s385 + $0x30] sm:$0xff]
        %v460 = vld [vmem:[%s385 + $0x38] sm:$0xff]
        %v461 = vld [vmem:[%s2] sm:$0xff]
        %v462 = vld [vmem:[%s2 + $0x8] sm:$0xff]
        %v463 = vld [vmem:[%s2 + $0x10] sm:$0x3]
        %v464 = vld [vmem:[%s2 + $0x18] sm:$0x3]
        %v465 = vadd.f32 %v445, %v446
        %466 = vadd.xlane.f32.xlu0 %v465
        %v467 = vpop.xlane.xlu0 %466
        %v468 = vadd.f32 %v447, %v448
        %469 = vadd.xlane.f32.xlu0 %v468
        %v470 = vpop.xlane.xlu0 %469
        %v471 = vadd.f32 %v449, %v450
        %472 = vadd.xlane.f32.xlu0 %v471
        %v473 = vpop.xlane.xlu0 %472
        %v474 = vadd.f32 %v451, %v452
        %475 = vadd.xlane.f32.xlu0 %v474
        %v476 = vpop.xlane.xlu0 %475
        %v477 = vmul.f32 %v467, 0.00390625
        %v478 = vmul.f32 %v470, 0.00390625
        %v479 = vmul.f32 %v473, 0.00390625
        %v480 = vmul.f32 %v476, 0.00390625
        %v481 = vadd.f32 %v453, %v454
        %482 = vadd.xlane.f32.xlu0 %v481
        %v483 = vpop.xlane.xlu0 %482
        %v484 = vadd.f32 %v455, %v456
        %485 = vadd.xlane.f32.xlu0 %v484
        %v486 = vpop.xlane.xlu0 %485
        %v487 = vadd.f32 %v457, %v458
        %488 = vadd.xlane.f32.xlu0 %v487
        %v489 = vpop.xlane.xlu0 %488
        %v490 = vadd.f32 %v459, %v460
        %491 = vadd.xlane.f32.xlu0 %v490
        %v492 = vpop.xlane.xlu0 %491
        %v493 = vmul.f32 %v483, 0.00390625
        %v494 = vmul.f32 %v486, 0.00390625
        %v495 = vmul.f32 %v489, 0.00390625
        %v496 = vmul.f32 %v492, 0.00390625
        %v497 = vmax.f32 %v445, %v446
        %498 = vmax.xlane.f32.xlu0 %v497
        %v499 = vpop.xlane.xlu0 %498
        %v500 = vmax.f32 %v447, %v448
        %501 = vmax.xlane.f32.xlu0 %v500
        %v502 = vpop.xlane.xlu0 %501
        %v503 = vmax.f32 %v449, %v450
        %504 = vmax.xlane.f32.xlu0 %v503
        %v505 = vpop.xlane.xlu0 %504
        %v506 = vmax.f32 %v451, %v452
        %507 = vmax.xlane.f32.xlu0 %v506
        %v508 = vpop.xlane.xlu0 %507
        %v509 = vmax.f32 %v453, %v454
        %510 = vmax.xlane.f32.xlu0 %v509
        %v511 = vpop.xlane.xlu0 %510
        %v512 = vmax.f32 %v455, %v456
        %513 = vmax.xlane.f32.xlu0 %v512
        %v514 = vpop.xlane.xlu0 %513
        %v515 = vmax.f32 %v457, %v458
        %516 = vmax.xlane.f32.xlu0 %v515
        %v517 = vpop.xlane.xlu0 %516
        %v518 = vmax.f32 %v459, %v460
        %519 = vmax.xlane.f32.xlu0 %v518
        %v520 = vpop.xlane.xlu0 %519
        %v521 = vld [vmem:[%s3] sm:$0xff]
        %v522 = vld [vmem:[%s3 + $0x8] sm:$0xff]
        %v523 = vld [vmem:[%s3 + $0x10] sm:$0xff]
        %v524 = vld [vmem:[%s3 + $0x18] sm:$0xff]
        %v525 = vld [vmem:[%s3 + $0x20] sm:$0xff]
        %v526 = vld [vmem:[%s3 + $0x28] sm:$0xff]
        %v527 = vld [vmem:[%s3 + $0x30] sm:$0xff]
        %v528 = vld [vmem:[%s3 + $0x38] sm:$0xff]
        %530 = vset.pattern.permute.xlu0 0
        %531 = vperm.xlu0 %530, %v477
        %v532 = vpop.permute.xlu0 %531
        %535 = vset.pattern.permute.xlu0 0
        %536 = vperm.xlu0 %535, %v478
        %v537 = vpop.permute.xlu0 %536
        %540 = vset.pattern.permute.xlu0 0
        %541 = vperm.xlu0 %540, %v493
        %v542 = vpop.permute.xlu0 %541
        %545 = vset.pattern.permute.xlu0 0
        %546 = vperm.xlu0 %545, %v494
        %v547 = vpop.permute.xlu0 %546
        %550 = vset.pattern.permute.xlu0 0
        %551 = vperm.xlu0 %550, %v499
        %v552 = vpop.permute.xlu0 %551
        %555 = vset.pattern.permute.xlu0 0
        %556 = vperm.xlu0 %555, %v502
        %v557 = vpop.permute.xlu0 %556
        %560 = vset.pattern.permute.xlu0 0
        %561 = vperm.xlu0 %560, %v511
        %v562 = vpop.permute.xlu0 %561
        %565 = vset.pattern.permute.xlu0 0
        %566 = vperm.xlu0 %565, %v514
        %v567 = vpop.permute.xlu0 %566
        %570 = vset.pattern.permute.xlu0 0
        %571 = vperm.xlu0 %570, %v479
        %v572 = vpop.permute.xlu0 %571
        %575 = vset.pattern.permute.xlu0 0
        %576 = vperm.xlu0 %575, %v480
        %v577 = vpop.permute.xlu0 %576
        %580 = vset.pattern.permute.xlu0 0
        %581 = vperm.xlu0 %580, %v495
        %v582 = vpop.permute.xlu0 %581
        %585 = vset.pattern.permute.xlu0 0
        %586 = vperm.xlu0 %585, %v496
        %v587 = vpop.permute.xlu0 %586
        %590 = vset.pattern.permute.xlu0 0
        %591 = vperm.xlu0 %590, %v505
        %v592 = vpop.permute.xlu0 %591
        %595 = vset.pattern.permute.xlu0 0
        %596 = vperm.xlu0 %595, %v508
        %v597 = vpop.permute.xlu0 %596
        %600 = vset.pattern.permute.xlu0 0
        %601 = vperm.xlu0 %600, %v517
        %v602 = vpop.permute.xlu0 %601
        %605 = vset.pattern.permute.xlu0 0
        %606 = vperm.xlu0 %605, %v520
        %v607 = vpop.permute.xlu0 %606
        %v609 = vmul.f32 %v532, %v521
        %v610 = vmul.f32 %v537, %v522
        %v611 = vmul.f32 %v542, %v523
        %v612 = vmul.f32 %v547, %v524
        %v613 = vmul.f32 %v552, %v525
        %v614 = vmul.f32 %v557, %v526
        %v615 = vmul.f32 %v562, %v527
        %v616 = vmul.f32 %v567, %v528
        %v617 = vmul.f32 %v572, %v521
        %v618 = vmul.f32 %v577, %v522
        %v619 = vmul.f32 %v582, %v523
        %v620 = vmul.f32 %v587, %v524
        %v621 = vmul.f32 %v592, %v525
        %v622 = vmul.f32 %v597, %v526
        %v623 = vmul.f32 %v602, %v527
        %v624 = vmul.f32 %v607, %v528
        %vm625 = vcmask 31744
        %v626 = vsel %vm625, %v609, 0.0
        %v627 = vsel %vm625, %v610, 0.0
        %v628 = vadd.f32 %v626, %v627
        %v629 = vsel %vm625, %v611, 0.0
        %v630 = vadd.f32 %v628, %v629
        %v631 = vsel %vm625, %v612, 0.0
        %v632 = vadd.f32 %v630, %v631
        %v633 = vsel %vm625, %v613, 0.0
        %v634 = vadd.f32 %v632, %v633
        %v635 = vsel %vm625, %v614, 0.0
        %v636 = vadd.f32 %v634, %v635
        %v637 = vsel %vm625, %v615, 0.0
        %v638 = vadd.f32 %v636, %v637
        %v639 = vsel %vm625, %v616, 0.0
        %v640 = vadd.f32 %v638, %v639
        %v641 = vrot.slane %v640, 4
        %v642 = vadd.f32 %v640, %v641
        %v643 = vrot.slane %v642, 2
        %v644 = vadd.f32 %v642, %v643
        %v645 = vrot.slane %v644, 1
        %v646 = vadd.f32 %v644, %v645
        %v647 = vsel %vm625, %v617, 0.0
        %v648 = vsel %vm625, %v618, 0.0
        %v649 = vadd.f32 %v647, %v648
        %v650 = vsel %vm625, %v619, 0.0
        %v651 = vadd.f32 %v649, %v650
        %v652 = vsel %vm625, %v620, 0.0
        %v653 = vadd.f32 %v651, %v652
        %v654 = vsel %vm625, %v621, 0.0
        %v655 = vadd.f32 %v653, %v654
        %v656 = vsel %vm625, %v622, 0.0
        %v657 = vadd.f32 %v655, %v656
        %v658 = vsel %vm625, %v623, 0.0
        %v659 = vadd.f32 %v657, %v658
        %v660 = vsel %vm625, %v624, 0.0
        %v661 = vadd.f32 %v659, %v660
        %v662 = vrot.slane %v661, 4
        %v663 = vadd.f32 %v661, %v662
        %v664 = vrot.slane %v663, 2
        %v665 = vadd.f32 %v663, %v664
        %v666 = vrot.slane %v665, 1
        %v667 = vadd.f32 %v665, %v666
        %v668 = vld [vmem:[%s4] sm:$0x1]
        %v669 = vadd.f32 %v646, %v668
        %v670 = vadd.f32 %v667, %v668
        %vm671 = vcmp.ge.f32.partialorder %v669, 0.0
        %vm672 = vcmp.ge.f32.partialorder %v670, 0.0
        %v673 = vmul.f32 %v669, 0.1
        %v674 = vmul.f32 %v670, 0.1
        %v675 = vsel %vm671, %v669, %v673
        %v676 = vsel %vm672, %v670, %v674
        %v677 = vld [vmem:[%s5] sm:$0xff]
        %v678 = vld [vmem:[%s5 + $0x8] sm:$0xff]
        %v679 = vld [vmem:[%s5 + $0x10] sm:$0xff]
        %v680 = vld [vmem:[%s5 + $0x18] sm:$0xff]
        %v681 = vlaneseq
        %v682 = vshrl.u32 %v681, 7
        %v683 = vsub.s32 0, %v682
        %v684 = vrot.slane %v675, %v683
        %v685 = vlaneseq
        %v686 = vshrl.u32 %v685, 7
        %v687 = vsub.s32 0, %v686
        %v688 = vrot.slane %v676, %v687
        %v689 = vmul.f32 %v684, %v677
        %v690 = vmul.f32 %v684, %v678
        %v691 = vmul.f32 %v684, %v679
        %v692 = vmul.f32 %v684, %v680
        %v693 = vmul.f32 %v688, %v677
        %v694 = vmul.f32 %v688, %v678
        %v695 = vmul.f32 %v688, %v679
        %v696 = vmul.f32 %v688, %v680
        %v697 = vsel %vm625, %v689, 0.0
        %698 = vadd.xlane.f32.xlu0 %v697
        %v699 = vpop.xlane.xlu0 %698
        %v700 = vsel %vm625, %v690, 0.0
        %701 = vadd.xlane.f32.xlu0 %v700
        %v702 = vpop.xlane.xlu0 %701
        %v703 = vsel %vm625, %v691, 0.0
        %704 = vadd.xlane.f32.xlu0 %v703
        %v705 = vpop.xlane.xlu0 %704
        %v706 = vsel %vm625, %v692, 0.0
        %707 = vadd.xlane.f32.xlu0 %v706
        %v708 = vpop.xlane.xlu0 %707
        %v709 = vsel %vm625, %v693, 0.0
        %710 = vadd.xlane.f32.xlu0 %v709
        %v711 = vpop.xlane.xlu0 %710
        %v712 = vsel %vm625, %v694, 0.0
        %713 = vadd.xlane.f32.xlu0 %v712
        %v714 = vpop.xlane.xlu0 %713
        %v715 = vsel %vm625, %v695, 0.0
        %716 = vadd.xlane.f32.xlu0 %v715
        %v717 = vpop.xlane.xlu0 %716
        %v718 = vsel %vm625, %v696, 0.0
        %719 = vadd.xlane.f32.xlu0 %v718
        %v720 = vpop.xlane.xlu0 %719
        %v721 = vld [vmem:[%s6] sm:$0xff]
        %v722 = vld [vmem:[%s6 + $0x8] sm:$0xff]
        %v723 = vld [vmem:[%s6 + $0x10] sm:$0xff]
        %v724 = vld [vmem:[%s6 + $0x18] sm:$0xff]
        %v725 = vadd.f32 %v699, %v721
        %v726 = vadd.f32 %v702, %v722
        %v727 = vadd.f32 %v705, %v723
        %v728 = vadd.f32 %v708, %v724
        %v729 = vadd.f32 %v711, %v721
        %v730 = vadd.f32 %v714, %v722
        %v731 = vadd.f32 %v717, %v723
        %v732 = vadd.f32 %v720, %v724
        %v733 = vxor.u32 %v725, 2147483648
        %v734 = vxor.u32 %v726, 2147483648
        %v735 = vxor.u32 %v727, 2147483648
        %v736 = vxor.u32 %v728, 2147483648
        %v737 = vxor.u32 %v729, 2147483648
        %v738 = vxor.u32 %v730, 2147483648
        %v739 = vxor.u32 %v731, 2147483648
        %v740 = vxor.u32 %v732, 2147483648
        %v741 = vmul.f32 %v733, 1.442695
        %v742 = vpow.pop %v741
        %v743 = vmul.f32 %v734, 1.442695
        %v744 = vpow.pop %v743
        %v745 = vmul.f32 %v735, 1.442695
        %v746 = vpow.pop %v745
        %v747 = vmul.f32 %v736, 1.442695
        %v748 = vpow.pop %v747
        %v749 = vmul.f32 %v737, 1.442695
        %v750 = vpow.pop %v749
        %v751 = vmul.f32 %v738, 1.442695
        %v752 = vpow.pop %v751
        %v753 = vmul.f32 %v739, 1.442695
        %v754 = vpow.pop %v753
        %v755 = vmul.f32 %v740, 1.442695
        %v756 = vpow.pop %v755
        %v757 = vadd.f32 %v742, 1.0
        %v758 = vadd.f32 %v744, 1.0
        %v759 = vadd.f32 %v746, 1.0
        %v760 = vadd.f32 %v748, 1.0
        %v761 = vadd.f32 %v750, 1.0
        %v762 = vadd.f32 %v752, 1.0
        %v763 = vadd.f32 %v754, 1.0
        %v764 = vadd.f32 %v756, 1.0
        %v765 = vrcp.pop %v757
        %v766 = vmul.f32 1.0, %v765
        %v767 = vrcp.pop %v758
        %v768 = vmul.f32 1.0, %v767
        %v769 = vrcp.pop %v759
        %v770 = vmul.f32 1.0, %v769
        %v771 = vrcp.pop %v760
        %v772 = vmul.f32 1.0, %v771
        %v773 = vrcp.pop %v761
        %v774 = vmul.f32 1.0, %v773
        %v775 = vrcp.pop %v762
        %v776 = vmul.f32 1.0, %v775
        %v777 = vrcp.pop %v763
        %v778 = vmul.f32 1.0, %v777
        %v779 = vrcp.pop %v764
        %v780 = vmul.f32 1.0, %v779
        %782 = vset.pattern.permute.xlu0 0
        %783 = vperm.xlu0 %782, %v766
        %v784 = vpop.permute.xlu0 %783
        %787 = vset.pattern.permute.xlu0 0
        %788 = vperm.xlu0 %787, %v768
        %v789 = vpop.permute.xlu0 %788
        %792 = vset.pattern.permute.xlu0 0
        %793 = vperm.xlu0 %792, %v774
        %v794 = vpop.permute.xlu0 %793
        %797 = vset.pattern.permute.xlu0 0
        %798 = vperm.xlu0 %797, %v776
        %v799 = vpop.permute.xlu0 %798
        %v801 = vmul.f32 %v445, %v784
        %v802 = vmul.f32 %v446, %v784
        %v803 = vmul.f32 %v447, %v789
        %v804 = vmul.f32 %v448, %v789
        %v805 = vmul.f32 %v449, %v794
        %v806 = vmul.f32 %v450, %v794
        %v807 = vmul.f32 %v451, %v799
        %v808 = vmul.f32 %v452, %v799
        %810 = vset.pattern.permute.xlu0 0
        %811 = vperm.xlu0 %810, %v770
        %v812 = vpop.permute.xlu0 %811
        %815 = vset.pattern.permute.xlu0 0
        %816 = vperm.xlu0 %815, %v772
        %v817 = vpop.permute.xlu0 %816
        %820 = vset.pattern.permute.xlu0 0
        %821 = vperm.xlu0 %820, %v778
        %v822 = vpop.permute.xlu0 %821
        %825 = vset.pattern.permute.xlu0 0
        %826 = vperm.xlu0 %825, %v780
        %v827 = vpop.permute.xlu0 %826
        %v829 = vmul.f32 %v453, %v812
        %v830 = vmul.f32 %v454, %v812
        %v831 = vmul.f32 %v455, %v817
        %v832 = vmul.f32 %v456, %v817
        %v833 = vmul.f32 %v457, %v822
        %v834 = vmul.f32 %v458, %v822
        %v835 = vmul.f32 %v459, %v827
        %v836 = vmul.f32 %v460, %v827
        %v837 = vld [vmem:[%s7] sm:$0xff]
        %v838 = vld [vmem:[%s7 + $0x8] sm:$0xff]
        %v839 = vld [vmem:[%s7 + $0x10] sm:$0x3]
        %v840 = vld [vmem:[%s8] sm:$0xff]
        %v841 = vld [vmem:[%s8 + $0x8] sm:$0xff]
        %v842 = vld [vmem:[%s8 + $0x10] sm:$0x3]
        %vm843 = vcmask 130048
        %v845 = vsel %vm843, %v840, 0
        %v848 = vsel %vm843, %v841, 0
        %v851 = vsel %vm843, %v842, 0
        %853 = vmatprep.subr.mxu0 %v830
        %854 = vmatpush1.msra.mxu0 %v829
        %855 = vmatprep.subr.mxu0 %v832
        %856 = vmatpush1.msra.mxu0 %v831
        %857 = vmatprep.subr.mxu0 0.0
        %858 = vmatpush1.msra.mxu0 0.0
        %859 = vmatprep.subr.mxu0 0.0
        %860 = vmatpush1.msra.mxu0 0.0
        %861 = vmatprep.subr.mxu0 0.0
        %862 = vmatpush1.msra.mxu0 0.0
        %863 = vmatprep.subr.mxu0 0.0
        %864 = vmatpush1.msra.mxu0 0.0
        %865 = vmatprep.subr.mxu0 0.0
        %866 = vmatpush1.msra.mxu0 0.0
        %867 = vmatprep.subr.mxu0 0.0
        %868 = vmatpush1.msra.mxu0 0.0
        %869 = vmatprep.subr.mxu0 0.0
        %870 = vmatpush1.msra.mxu0 0.0
        %871 = vmatprep.subr.mxu0 0.0
        %872 = vmatpush1.msra.mxu0 0.0
        %873 = vmatprep.subr.mxu0 0.0
        %874 = vmatpush1.msra.mxu0 0.0
        %875 = vmatprep.subr.mxu0 0.0
        %876 = vmatpush1.msra.mxu0 0.0
        %877 = vmatprep.subr.mxu0 0.0
        %878 = vmatpush1.msra.mxu0 0.0
        %879 = vmatprep.subr.mxu0 0.0
        %880 = vmatpush1.msra.mxu0 0.0
        %881 = vmatprep.subr.mxu0 0.0
        %882 = vmatpush1.msra.mxu0 0.0
        %883 = vmatprep.subr.mxu0 0.0
        %884 = vmatpush1.msra.mxu0 0.0
        %885 = vmatprep.subr.mxu0 0.0
        %886 = vmatpush1.msra.mxu0 0.0
        %887 = vmatprep.subr.mxu0 0.0
        %888 = vmatpush1.msra.mxu0 0.0
        %889 = vmatprep.subr.mxu0 0.0
        %890 = vmatpush1.msra.mxu0 0.0
        %891 = vmatprep.subr.mxu0 0.0
        %892 = vmatpush1.msra.mxu0 0.0
        %893 = vmatprep.subr.mxu0 0.0
        %894 = vmatpush1.msra.mxu0 0.0
        %895 = vmatprep.subr.mxu0 0.0
        %896 = vmatpush1.msra.mxu0 0.0
        %897 = vmatprep.subr.mxu0 0.0
        %898 = vmatpush1.msra.mxu0 0.0
        %899 = vmatprep.subr.mxu0 0.0
        %900 = vmatpush1.msra.mxu0 0.0
        %901 = vmatprep.subr.mxu0 0.0
        %902 = vmatpush1.msra.mxu0 0.0
        %903 = vmatprep.subr.mxu0 0.0
        %904 = vmatpush1.msra.mxu0 0.0
        %905 = vmatprep.subr.mxu0 0.0
        %906 = vmatpush1.msra.mxu0 0.0
        %907 = vmatprep.subr.mxu0 0.0
        %908 = vmatpush1.msra.mxu0 0.0
        %909 = vmatprep.subr.mxu0 0.0
        %910 = vmatpush1.msra.mxu0 0.0
        %911 = vmatprep.subr.mxu0 0.0
        %912 = vmatpush1.msra.mxu0 0.0
        %913 = vmatprep.subr.mxu0 0.0
        %914 = vmatpush1.msra.mxu0 0.0
        %915 = vmatprep.subr.mxu0 0.0
        %916 = vmatpush1.msra.mxu0 0.0
        %917 = vmatprep.mubr.f32.mxu0 0.0
        %918 = vmatmul.mubr.f32.gmra.mrb[0].mxu0 %v845
        %v919 = vpop.f32.mrb[0].mxu0
        %v920 = vadd.f32 0.0, %v919
        %v921 = vpop.f32.mrb[0].mxu0
        %v922 = vadd.f32 0.0, %v921
        %923 = vmatprep.mubr.f32.mxu0 0.0
        %924 = vmatmul.mubr.f32.gmra.mrb[0].mxu0 %v848
        %v925 = vpop.f32.mrb[0].mxu0
        %v926 = vadd.f32 0.0, %v925
        %v927 = vpop.f32.mrb[0].mxu0
        %v928 = vadd.f32 0.0, %v927
        %929 = vmatprep.mubr.f32.mxu0 0.0
        %930 = vmatmul.mubr.f32.gmra.mrb[0].mxu0 %v851
        %v931 = vpop.f32.mrb[0].mxu0
        %v932 = vadd.f32 0.0, %v931
        %v933 = vpop.f32.mrb[0].mxu0
        %v934 = vadd.f32 0.0, %v933
        %935 = vdwg.mxu0
        %936 = vmatprep.subr.mxu0 %v834
        %937 = vmatpush1.msra.mxu0 %v833
        %938 = vmatprep.subr.mxu0 %v836
        %939 = vmatpush1.msra.mxu0 %v835
        %940 = vmatprep.subr.mxu0 0.0
        %941 = vmatpush1.msra.mxu0 0.0
        %942 = vmatprep.subr.mxu0 0.0
        %943 = vmatpush1.msra.mxu0 0.0
        %944 = vmatprep.subr.mxu0 0.0
        %945 = vmatpush1.msra.mxu0 0.0
        %946 = vmatprep.subr.mxu0 0.0
        %947 = vmatpush1.msra.mxu0 0.0
        %948 = vmatprep.subr.mxu0 0.0
        %949 = vmatpush1.msra.mxu0 0.0
        %950 = vmatprep.subr.mxu0 0.0
        %951 = vmatpush1.msra.mxu0 0.0
        %952 = vmatprep.subr.mxu0 0.0
        %953 = vmatpush1.msra.mxu0 0.0
        %954 = vmatprep.subr.mxu0 0.0
        %955 = vmatpush1.msra.mxu0 0.0
        %956 = vmatprep.subr.mxu0 0.0
        %957 = vmatpush1.msra.mxu0 0.0
        %958 = vmatprep.subr.mxu0 0.0
        %959 = vmatpush1.msra.mxu0 0.0
        %960 = vmatprep.subr.mxu0 0.0
        %961 = vmatpush1.msra.mxu0 0.0
        %962 = vmatprep.subr.mxu0 0.0
        %963 = vmatpush1.msra.mxu0 0.0
        %964 = vmatprep.subr.mxu0 0.0
        %965 = vmatpush1.msra.mxu0 0.0
        %966 = vmatprep.subr.mxu0 0.0
        %967 = vmatpush1.msra.mxu0 0.0
        %968 = vmatprep.subr.mxu0 0.0
        %969 = vmatpush1.msra.mxu0 0.0
        %970 = vmatprep.subr.mxu0 0.0
        %971 = vmatpush1.msra.mxu0 0.0
        %972 = vmatprep.subr.mxu0 0.0
        %973 = vmatpush1.msra.mxu0 0.0
        %974 = vmatprep.subr.mxu0 0.0
        %975 = vmatpush1.msra.mxu0 0.0
        %976 = vmatprep.subr.mxu0 0.0
        %977 = vmatpush1.msra.mxu0 0.0
        %978 = vmatprep.subr.mxu0 0.0
        %979 = vmatpush1.msra.mxu0 0.0
        %980 = vmatprep.subr.mxu0 0.0
        %981 = vmatpush1.msra.mxu0 0.0
        %982 = vmatprep.subr.mxu0 0.0
        %983 = vmatpush1.msra.mxu0 0.0
        %984 = vmatprep.subr.mxu0 0.0
        %985 = vmatpush1.msra.mxu0 0.0
        %986 = vmatprep.subr.mxu0 0.0
        %987 = vmatpush1.msra.mxu0 0.0
        %988 = vmatprep.subr.mxu0 0.0
        %989 = vmatpush1.msra.mxu0 0.0
        %990 = vmatprep.subr.mxu0 0.0
        %991 = vmatpush1.msra.mxu0 0.0
        %992 = vmatprep.subr.mxu0 0.0
        %993 = vmatpush1.msra.mxu0 0.0
        %994 = vmatprep.subr.mxu0 0.0
        %995 = vmatpush1.msra.mxu0 0.0
        %996 = vmatprep.subr.mxu0 0.0
        %997 = vmatpush1.msra.mxu0 0.0
        %998 = vmatprep.subr.mxu0 0.0
        %999 = vmatpush1.msra.mxu0 0.0
        %1000 = vmatprep.mubr.f32.mxu0 0.0
        %1001 = vmatmul.mubr.f32.gmra.mrb[0].mxu0 %v845
        %v1002 = vpop.f32.mrb[0].mxu0
        %v1003 = vadd.f32 0.0, %v1002
        %v1004 = vpop.f32.mrb[0].mxu0
        %v1005 = vadd.f32 0.0, %v1004
        %1006 = vmatprep.mubr.f32.mxu0 0.0
        %1007 = vmatmul.mubr.f32.gmra.mrb[0].mxu0 %v848
        %v1008 = vpop.f32.mrb[0].mxu0
        %v1009 = vadd.f32 0.0, %v1008
        %v1010 = vpop.f32.mrb[0].mxu0
        %v1011 = vadd.f32 0.0, %v1010
        %1012 = vmatprep.mubr.f32.mxu0 0.0
        %1013 = vmatmul.mubr.f32.gmra.mrb[0].mxu0 %v851
        %v1014 = vpop.f32.mrb[0].mxu0
        %v1015 = vadd.f32 0.0, %v1014
        %v1016 = vpop.f32.mrb[0].mxu0
        %v1017 = vadd.f32 0.0, %v1016
        %1018 = vdwg.mxu0
        %v1020 = vsel %vm843, %v837, 0
        %v1023 = vsel %vm843, %v838, 0
        %v1026 = vsel %vm843, %v839, 0
        %1028 = vmatprep.subr.mxu0 %v802
        %1029 = vmatpush1.msra.mxu0 %v801
        %1030 = vmatprep.subr.mxu0 %v804
        %1031 = vmatpush1.msra.mxu0 %v803
        %1032 = vmatprep.subr.mxu0 0.0
        %1033 = vmatpush1.msra.mxu0 0.0
        %1034 = vmatprep.subr.mxu0 0.0
        %1035 = vmatpush1.msra.mxu0 0.0
        %1036 = vmatprep.subr.mxu0 0.0
        %1037 = vmatpush1.msra.mxu0 0.0
        %1038 = vmatprep.subr.mxu0 0.0
        %1039 = vmatpush1.msra.mxu0 0.0
        %1040 = vmatprep.subr.mxu0 0.0
        %1041 = vmatpush1.msra.mxu0 0.0
        %1042 = vmatprep.subr.mxu0 0.0
        %1043 = vmatpush1.msra.mxu0 0.0
        %1044 = vmatprep.subr.mxu0 0.0
        %1045 = vmatpush1.msra.mxu0 0.0
        %1046 = vmatprep.subr.mxu0 0.0
        %1047 = vmatpush1.msra.mxu0 0.0
        %1048 = vmatprep.subr.mxu0 0.0
        %1049 = vmatpush1.msra.mxu0 0.0
        %1050 = vmatprep.subr.mxu0 0.0
        %1051 = vmatpush1.msra.mxu0 0.0
        %1052 = vmatprep.subr.mxu0 0.0
        %1053 = vmatpush1.msra.mxu0 0.0
        %1054 = vmatprep.subr.mxu0 0.0
        %1055 = vmatpush1.msra.mxu0 0.0
        %1056 = vmatprep.subr.mxu0 0.0
        %1057 = vmatpush1.msra.mxu0 0.0
        %1058 = vmatprep.subr.mxu0 0.0
        %1059 = vmatpush1.msra.mxu0 0.0
        %1060 = vmatprep.subr.mxu0 0.0
        %1061 = vmatpush1.msra.mxu0 0.0
        %1062 = vmatprep.subr.mxu0 0.0
        %1063 = vmatpush1.msra.mxu0 0.0
        %1064 = vmatprep.subr.mxu0 0.0
        %1065 = vmatpush1.msra.mxu0 0.0
        %1066 = vmatprep.subr.mxu0 0.0
        %1067 = vmatpush1.msra.mxu0 0.0
        %1068 = vmatprep.subr.mxu0 0.0
        %1069 = vmatpush1.msra.mxu0 0.0
        %1070 = vmatprep.subr.mxu0 0.0
        %1071 = vmatpush1.msra.mxu0 0.0
        %1072 = vmatprep.subr.mxu0 0.0
        %1073 = vmatpush1.msra.mxu0 0.0
        %1074 = vmatprep.subr.mxu0 0.0
        %1075 = vmatpush1.msra.mxu0 0.0
        %1076 = vmatprep.subr.mxu0 0.0
        %1077 = vmatpush1.msra.mxu0 0.0
        %1078 = vmatprep.subr.mxu0 0.0
        %1079 = vmatpush1.msra.mxu0 0.0
        %1080 = vmatprep.subr.mxu0 0.0
        %1081 = vmatpush1.msra.mxu0 0.0
        %1082 = vmatprep.subr.mxu0 0.0
        %1083 = vmatpush1.msra.mxu0 0.0
        %1084 = vmatprep.subr.mxu0 0.0
        %1085 = vmatpush1.msra.mxu0 0.0
        %1086 = vmatprep.subr.mxu0 0.0
        %1087 = vmatpush1.msra.mxu0 0.0
        %1088 = vmatprep.subr.mxu0 0.0
        %1089 = vmatpush1.msra.mxu0 0.0
        %1090 = vmatprep.subr.mxu0 0.0
        %1091 = vmatpush1.msra.mxu0 0.0
        %1092 = vmatprep.mubr.f32.mxu0 0.0
        %1093 = vmatmul.mubr.f32.gmra.mrb[0].mxu0 %v1020
        %v1094 = vpop.f32.mrb[0].mxu0
        %v1095 = vadd.f32 %v920, %v1094
        %v1096 = vpop.f32.mrb[0].mxu0
        %v1097 = vadd.f32 %v922, %v1096
        %1098 = vmatprep.mubr.f32.mxu0 0.0
        %1099 = vmatmul.mubr.f32.gmra.mrb[0].mxu0 %v1023
        %v1100 = vpop.f32.mrb[0].mxu0
        %v1101 = vadd.f32 %v926, %v1100
        %v1102 = vpop.f32.mrb[0].mxu0
        %v1103 = vadd.f32 %v928, %v1102
        %1104 = vmatprep.mubr.f32.mxu0 0.0
        %1105 = vmatmul.mubr.f32.gmra.mrb[0].mxu0 %v1026
        %v1106 = vpop.f32.mrb[0].mxu0
        %v1107 = vadd.f32 %v932, %v1106
        %v1108 = vpop.f32.mrb[0].mxu0
        %v1109 = vadd.f32 %v934, %v1108
        %1110 = vdwg.mxu0
        %1111 = vmatprep.subr.mxu0 %v806
        %1112 = vmatpush1.msra.mxu0 %v805
        %1113 = vmatprep.subr.mxu0 %v808
        %1114 = vmatpush1.msra.mxu0 %v807
        %1115 = vmatprep.subr.mxu0 0.0
        %1116 = vmatpush1.msra.mxu0 0.0
        %1117 = vmatprep.subr.mxu0 0.0
        %1118 = vmatpush1.msra.mxu0 0.0
        %1119 = vmatprep.subr.mxu0 0.0
        %1120 = vmatpush1.msra.mxu0 0.0
        %1121 = vmatprep.subr.mxu0 0.0
        %1122 = vmatpush1.msra.mxu0 0.0
        %1123 = vmatprep.subr.mxu0 0.0
        %1124 = vmatpush1.msra.mxu0 0.0
        %1125 = vmatprep.subr.mxu0 0.0
        %1126 = vmatpush1.msra.mxu0 0.0
        %1127 = vmatprep.subr.mxu0 0.0
        %1128 = vmatpush1.msra.mxu0 0.0
        %1129 = vmatprep.subr.mxu0 0.0
        %1130 = vmatpush1.msra.mxu0 0.0
        %1131 = vmatprep.subr.mxu0 0.0
        %1132 = vmatpush1.msra.mxu0 0.0
        %1133 = vmatprep.subr.mxu0 0.0
        %1134 = vmatpush1.msra.mxu0 0.0
        %1135 = vmatprep.subr.mxu0 0.0
        %1136 = vmatpush1.msra.mxu0 0.0
        %1137 = vmatprep.subr.mxu0 0.0
        %1138 = vmatpush1.msra.mxu0 0.0
        %1139 = vmatprep.subr.mxu0 0.0
        %1140 = vmatpush1.msra.mxu0 0.0
        %1141 = vmatprep.subr.mxu0 0.0
        %1142 = vmatpush1.msra.mxu0 0.0
        %1143 = vmatprep.subr.mxu0 0.0
        %1144 = vmatpush1.msra.mxu0 0.0
        %1145 = vmatprep.subr.mxu0 0.0
        %1146 = vmatpush1.msra.mxu0 0.0
        %1147 = vmatprep.subr.mxu0 0.0
        %1148 = vmatpush1.msra.mxu0 0.0
        %1149 = vmatprep.subr.mxu0 0.0
        %1150 = vmatpush1.msra.mxu0 0.0
        %1151 = vmatprep.subr.mxu0 0.0
        %1152 = vmatpush1.msra.mxu0 0.0
        %1153 = vmatprep.subr.mxu0 0.0
        %1154 = vmatpush1.msra.mxu0 0.0
        %1155 = vmatprep.subr.mxu0 0.0
        %1156 = vmatpush1.msra.mxu0 0.0
        %1157 = vmatprep.subr.mxu0 0.0
        %1158 = vmatpush1.msra.mxu0 0.0
        %1159 = vmatprep.subr.mxu0 0.0
        %1160 = vmatpush1.msra.mxu0 0.0
        %1161 = vmatprep.subr.mxu0 0.0
        %1162 = vmatpush1.msra.mxu0 0.0
        %1163 = vmatprep.subr.mxu0 0.0
        %1164 = vmatpush1.msra.mxu0 0.0
        %1165 = vmatprep.subr.mxu0 0.0
        %1166 = vmatpush1.msra.mxu0 0.0
        %1167 = vmatprep.subr.mxu0 0.0
        %1168 = vmatpush1.msra.mxu0 0.0
        %1169 = vmatprep.subr.mxu0 0.0
        %1170 = vmatpush1.msra.mxu0 0.0
        %1171 = vmatprep.subr.mxu0 0.0
        %1172 = vmatpush1.msra.mxu0 0.0
        %1173 = vmatprep.subr.mxu0 0.0
        %1174 = vmatpush1.msra.mxu0 0.0
        %1175 = vmatprep.mubr.f32.mxu0 0.0
        %1176 = vmatmul.mubr.f32.gmra.mrb[0].mxu0 %v1020
        %v1177 = vpop.f32.mrb[0].mxu0
        %v1178 = vadd.f32 %v1003, %v1177
        %v1179 = vpop.f32.mrb[0].mxu0
        %v1180 = vadd.f32 %v1005, %v1179
        %1181 = vmatprep.mubr.f32.mxu0 0.0
        %1182 = vmatmul.mubr.f32.gmra.mrb[0].mxu0 %v1023
        %v1183 = vpop.f32.mrb[0].mxu0
        %v1184 = vadd.f32 %v1009, %v1183
        %v1185 = vpop.f32.mrb[0].mxu0
        %v1186 = vadd.f32 %v1011, %v1185
        %1187 = vmatprep.mubr.f32.mxu0 0.0
        %1188 = vmatmul.mubr.f32.gmra.mrb[0].mxu0 %v1026
        %v1189 = vpop.f32.mrb[0].mxu0
        %v1190 = vadd.f32 %v1015, %v1189
        %v1191 = vpop.f32.mrb[0].mxu0
        %v1192 = vadd.f32 %v1017, %v1191
        %1193 = vdwg.mxu0
        %1194 = vrot.lane.b32.xlu0 %v1095, 17
        %v1195 = vpop.permute.xlu0 %1194
        %1196 = vrot.lane.b32.xlu0 %v1178, 17
        %v1197 = vpop.permute.xlu0 %1196
        %1198 = vrot.lane.b32.xlu0 %v1097, 17
        %v1199 = vpop.permute.xlu0 %1198
        %1200 = vrot.lane.b32.xlu0 %v1180, 17
        %v1201 = vpop.permute.xlu0 %1200
        %v1202 = vlaneseq
        %v1203 = vand.u32 %v1202, 127
        %vm1204 = vcmp.lt.s32.totalorder %v1203, 17
        %v1205 = vsel %vm1204, %v1195, %v1199
        %v1206 = vsel %vm1204, %v1197, %v1201
        %v1207 = vsel %vm1204, %v1199, %v1195
        %v1208 = vsel %vm1204, %v1201, %v1197
        %v1209 = vlaneseq
        %v1210 = vshrl.u32 %v1209, 7
        %v1211 = vsub.s32 0, %v1210
        %v1212 = vrot.slane %v461, %v1211
        %v1213 = vlaneseq
        %v1214 = vshrl.u32 %v1213, 7
        %v1215 = vsub.s32 0, %v1214
        %v1216 = vrot.slane %v462, %v1215
        %v1217 = vmul.f32 %v1207, %v1212
        %v1218 = vmul.f32 %v1205, %v1216
        %v1219 = vmul.f32 %v1208, %v1212
        %v1220 = vmul.f32 %v1206, %v1216
        %v1221 = vadd.f32 %v1101, %v1217
        %v1222 = vadd.f32 %v1103, %v1218
        %v1223 = vadd.f32 %v1184, %v1219
        %v1224 = vadd.f32 %v1186, %v1220
        %v1229 = vrot.slane %v1095, 2
        %v1230 = vrot.slane %v1097, 2
        %v1231 = vrot.slane %v1178, 2
        %v1232 = vrot.slane %v1180, 2
        %1237 = vrot.lane.b32.xlu0 %v1229, 16
        %v1238 = vpop.permute.xlu0 %1237
        %1239 = vrot.lane.b32.xlu0 %v1231, 16
        %v1240 = vpop.permute.xlu0 %1239
        %1241 = vrot.lane.b32.xlu0 %v1230, 16
        %v1242 = vpop.permute.xlu0 %1241
        %1243 = vrot.lane.b32.xlu0 %v1232, 16
        %v1244 = vpop.permute.xlu0 %1243
        %vm1245 = vcmp.lt.s32.totalorder %v1203, 16
        %v1246 = vsel %vm1245, %v1238, %v1242
        %v1247 = vsel %vm1245, %v1240, %v1244
        %v1248 = vsel %vm1245, %v1242, %v1238
        %v1249 = vsel %vm1245, %v1244, %v1240
        %v1250 = vlaneseq
        %v1251 = vshrl.u32 %v1250, 7
        %v1252 = vsub.s32 1, %v1251
        %v1253 = vrot.slane %v461, %v1252
        %v1254 = vlaneseq
        %v1255 = vshrl.u32 %v1254, 7
        %v1256 = vsub.s32 1, %v1255
        %v1257 = vrot.slane %v462, %v1256
        %v1258 = vmul.f32 %v1248, %v1253
        %v1259 = vmul.f32 %v1246, %v1257
        %v1260 = vmul.f32 %v1249, %v1253
        %v1261 = vmul.f32 %v1247, %v1257
        %v1262 = vadd.f32 %v1221, %v1258
        %v1263 = vadd.f32 %v1222, %v1259
        %v1264 = vadd.f32 %v1223, %v1260
        %v1265 = vadd.f32 %v1224, %v1261
        %v1266 = vrot.slane %v1095, 4
        %v1267 = vrot.slane %v1097, 4
        %v1268 = vrot.slane %v1178, 4
        %v1269 = vrot.slane %v1180, 4
        %1274 = vrot.lane.b32.xlu0 %v1266, 15
        %v1275 = vpop.permute.xlu0 %1274
        %1276 = vrot.lane.b32.xlu0 %v1268, 15
        %v1277 = vpop.permute.xlu0 %1276
        %1278 = vrot.lane.b32.xlu0 %v1267, 15
        %v1279 = vpop.permute.xlu0 %1278
        %1280 = vrot.lane.b32.xlu0 %v1269, 15
        %v1281 = vpop.permute.xlu0 %1280
        %vm1282 = vcmp.lt.s32.totalorder %v1203, 15
        %v1283 = vsel %vm1282, %v1275, %v1279
        %v1284 = vsel %vm1282, %v1277, %v1281
        %v1285 = vsel %vm1282, %v1279, %v1275
        %v1286 = vsel %vm1282, %v1281, %v1277
        %v1287 = vlaneseq
        %v1288 = vshrl.u32 %v1287, 7
        %v1289 = vsub.s32 2, %v1288
        %v1290 = vrot.slane %v461, %v1289
        %v1291 = vlaneseq
        %v1292 = vshrl.u32 %v1291, 7
        %v1293 = vsub.s32 2, %v1292
        %v1294 = vrot.slane %v462, %v1293
        %v1295 = vmul.f32 %v1285, %v1290
        %v1296 = vmul.f32 %v1283, %v1294
        %v1297 = vmul.f32 %v1286, %v1290
        %v1298 = vmul.f32 %v1284, %v1294
        %v1299 = vadd.f32 %v1262, %v1295
        %v1300 = vadd.f32 %v1263, %v1296
        %v1301 = vadd.f32 %v1264, %v1297
        %v1302 = vadd.f32 %v1265, %v1298
        %v1303 = vrot.slane %v1095, 6
        %v1304 = vrot.slane %v1097, 6
        %v1305 = vrot.slane %v1178, 6
        %v1306 = vrot.slane %v1180, 6
        %1311 = vrot.lane.b32.xlu0 %v1303, 1
        %v1312 = vpop.permute.xlu0 %1311
        %1313 = vrot.lane.b32.xlu0 %v1305, 1
        %v1314 = vpop.permute.xlu0 %1313
        %1315 = vrot.lane.b32.xlu0 %v1304, 1
        %v1316 = vpop.permute.xlu0 %1315
        %1317 = vrot.lane.b32.xlu0 %v1306, 1
        %v1318 = vpop.permute.xlu0 %1317
        %vm1319 = vcmp.lt.s32.totalorder %v1203, 1
        %v1320 = vsel %vm1319, %v1312, %v1316
        %v1321 = vsel %vm1319, %v1314, %v1318
        %v1322 = vsel %vm1319, %v1316, %v1312
        %v1323 = vsel %vm1319, %v1318, %v1314
        %v1324 = vlaneseq
        %v1325 = vshrl.u32 %v1324, 7
        %v1326 = vsub.s32 3, %v1325
        %v1327 = vrot.slane %v461, %v1326
        %v1328 = vlaneseq
        %v1329 = vshrl.u32 %v1328, 7
        %v1330 = vsub.s32 3, %v1329
        %v1331 = vrot.slane %v462, %v1330
        %v1332 = vmul.f32 %v1322, %v1327
        %v1333 = vmul.f32 %v1320, %v1331
        %v1334 = vmul.f32 %v1323, %v1327
        %v1335 = vmul.f32 %v1321, %v1331
        %v1336 = vadd.f32 %v1299, %v1332
        %v1337 = vadd.f32 %v1300, %v1333
        %v1338 = vadd.f32 %v1301, %v1334
        %v1339 = vadd.f32 %v1302, %v1335
        %v1344 = vrot.slane %v1101, 2
        %v1345 = vrot.slane %v1103, 2
        %v1346 = vrot.slane %v1184, 2
        %v1347 = vrot.slane %v1186, 2
        %1352 = vrot.lane.b32.xlu0 %v1344, 127
        %v1353 = vpop.permute.xlu0 %1352
        %1354 = vrot.lane.b32.xlu0 %v1346, 127
        %v1355 = vpop.permute.xlu0 %1354
        %1356 = vrot.lane.b32.xlu0 %v1345, 127
        %v1357 = vpop.permute.xlu0 %1356
        %1358 = vrot.lane.b32.xlu0 %v1347, 127
        %v1359 = vpop.permute.xlu0 %1358
        %vm1360 = vcmp.lt.s32.totalorder %v1203, 127
        %v1361 = vsel %vm1360, %v1353, %v1357
        %v1362 = vsel %vm1360, %v1355, %v1359
        %v1363 = vsel %vm1360, %v1357, %v1353
        %v1364 = vsel %vm1360, %v1359, %v1355
        %v1365 = vlaneseq
        %v1366 = vshrl.u32 %v1365, 7
        %v1367 = vsub.s32 5, %v1366
        %v1368 = vrot.slane %v461, %v1367
        %v1369 = vlaneseq
        %v1370 = vshrl.u32 %v1369, 7
        %v1371 = vsub.s32 5, %v1370
        %v1372 = vrot.slane %v462, %v1371
        %v1373 = vmul.f32 %v1361, %v1368
        %v1374 = vmul.f32 %v1363, %v1372
        %v1375 = vmul.f32 %v1362, %v1368
        %v1376 = vmul.f32 %v1364, %v1372
        %v1377 = vadd.f32 %v1336, %v1373
        %v1378 = vadd.f32 %v1337, %v1374
        %v1379 = vadd.f32 %v1338, %v1375
        %v1380 = vadd.f32 %v1339, %v1376
        %v1381 = vrot.slane %v1101, 4
        %v1382 = vrot.slane %v1103, 4
        %v1383 = vrot.slane %v1184, 4
        %v1384 = vrot.slane %v1186, 4
        %1389 = vrot.lane.b32.xlu0 %v1381, 113
        %v1390 = vpop.permute.xlu0 %1389
        %1391 = vrot.lane.b32.xlu0 %v1383, 113
        %v1392 = vpop.permute.xlu0 %1391
        %1393 = vrot.lane.b32.xlu0 %v1382, 113
        %v1394 = vpop.permute.xlu0 %1393
        %1395 = vrot.lane.b32.xlu0 %v1384, 113
        %v1396 = vpop.permute.xlu0 %1395
        %vm1397 = vcmp.lt.s32.totalorder %v1203, 113
        %v1398 = vsel %vm1397, %v1390, %v1394
        %v1399 = vsel %vm1397, %v1392, %v1396
        %v1400 = vsel %vm1397, %v1394, %v1390
        %v1401 = vsel %vm1397, %v1396, %v1392
        %v1402 = vlaneseq
        %v1403 = vshrl.u32 %v1402, 7
        %v1404 = vsub.s32 6, %v1403
        %v1405 = vrot.slane %v461, %v1404
        %v1406 = vlaneseq
        %v1407 = vshrl.u32 %v1406, 7
        %v1408 = vsub.s32 6, %v1407
        %v1409 = vrot.slane %v462, %v1408
        %v1410 = vmul.f32 %v1398, %v1405
        %v1411 = vmul.f32 %v1400, %v1409
        %v1412 = vmul.f32 %v1399, %v1405
        %v1413 = vmul.f32 %v1401, %v1409
        %v1414 = vadd.f32 %v1377, %v1410
        %v1415 = vadd.f32 %v1378, %v1411
        %v1416 = vadd.f32 %v1379, %v1412
        %v1417 = vadd.f32 %v1380, %v1413
        %v1418 = vrot.slane %v1101, 6
        %v1419 = vrot.slane %v1103, 6
        %v1420 = vrot.slane %v1184, 6
        %v1421 = vrot.slane %v1186, 6
        %1426 = vrot.lane.b32.xlu0 %v1418, 112
        %v1427 = vpop.permute.xlu0 %1426
        %1428 = vrot.lane.b32.xlu0 %v1420, 112
        %v1429 = vpop.permute.xlu0 %1428
        %1430 = vrot.lane.b32.xlu0 %v1419, 112
        %v1431 = vpop.permute.xlu0 %1430
        %1432 = vrot.lane.b32.xlu0 %v1421, 112
        %v1433 = vpop.permute.xlu0 %1432
        %vm1434 = vcmp.lt.s32.totalorder %v1203, 112
        %v1435 = vsel %vm1434, %v1427, %v1431
        %v1436 = vsel %vm1434, %v1429, %v1433
        %v1437 = vsel %vm1434, %v1431, %v1427
        %v1438 = vsel %vm1434, %v1433, %v1429
        %v1439 = vlaneseq
        %v1440 = vshrl.u32 %v1439, 7
        %v1441 = vsub.s32 7, %v1440
        %v1442 = vrot.slane %v461, %v1441
        %v1443 = vlaneseq
        %v1444 = vshrl.u32 %v1443, 7
        %v1445 = vsub.s32 7, %v1444
        %v1446 = vrot.slane %v462, %v1445
        %v1447 = vmul.f32 %v1435, %v1442
        %v1448 = vmul.f32 %v1437, %v1446
        %v1449 = vmul.f32 %v1436, %v1442
        %v1450 = vmul.f32 %v1438, %v1446
        %v1451 = vadd.f32 %v1414, %v1447
        %v1452 = vadd.f32 %v1415, %v1448
        %v1453 = vadd.f32 %v1416, %v1449
        %v1454 = vadd.f32 %v1417, %v1450
        %1455 = vrot.lane.b32.xlu0 %v1107, 111
        %v1456 = vpop.permute.xlu0 %1455
        %1457 = vrot.lane.b32.xlu0 %v1190, 111
        %v1458 = vpop.permute.xlu0 %1457
        %1459 = vrot.lane.b32.xlu0 %v1109, 111
        %v1460 = vpop.permute.xlu0 %1459
        %1461 = vrot.lane.b32.xlu0 %v1192, 111
        %v1462 = vpop.permute.xlu0 %1461
        %vm1463 = vcmp.lt.s32.totalorder %v1203, 111
        %v1464 = vsel %vm1463, %v1456, %v1460
        %v1465 = vsel %vm1463, %v1458, %v1462
        %v1466 = vsel %vm1463, %v1460, %v1456
        %v1467 = vsel %vm1463, %v1462, %v1458
        %v1468 = vlaneseq
        %v1469 = vshrl.u32 %v1468, 7
        %v1470 = vsub.s32 0, %v1469
        %v1471 = vrot.slane %v463, %v1470
        %v1472 = vlaneseq
        %v1473 = vshrl.u32 %v1472, 7
        %v1474 = vsub.s32 0, %v1473
        %v1475 = vrot.slane %v464, %v1474
        %v1476 = vmul.f32 %v1464, %v1471
        %v1477 = vmul.f32 %v1466, %v1475
        %v1478 = vmul.f32 %v1465, %v1471
        %v1479 = vmul.f32 %v1467, %v1475
        %v1480 = vadd.f32 %v1451, %v1476
        %v1481 = vadd.f32 %v1452, %v1477
        %v1482 = vadd.f32 %v1453, %v1478
        %v1483 = vadd.f32 %v1454, %v1479
        %v1484 = vld [vmem:[%s9] sm:$0x1]
        %1486 = vset.pattern.permute.xlu0 0
        %1487 = vperm.xlu0 %1486, %v1484
        %v1488 = vpop.permute.xlu0 %1487
        %v1490 = vlaneseq
        %v1491 = vshrl.u32 %v1490, 7
        %v1492 = vsub.s32 0, %v1491
        %v1493 = vrot.slane %v1488, %v1492
        %v1494 = vadd.f32 %v1480, %v1493
        %v1495 = vadd.f32 %v1481, %v1493
        %v1496 = vadd.f32 %v1482, %v1493
        %v1497 = vadd.f32 %v1483, %v1493
        %v1498 = vxor.u32 %v1494, 2147483648
        %v1499 = vxor.u32 %v1495, 2147483648
        %v1500 = vxor.u32 %v1496, 2147483648
        %v1501 = vxor.u32 %v1497, 2147483648
        %v1502 = vmul.f32 %v1498, 1.442695
        %v1503 = vpow.pop %v1502
        %v1504 = vmul.f32 %v1499, 1.442695
        %v1505 = vpow.pop %v1504
        %v1506 = vmul.f32 %v1500, 1.442695
        %v1507 = vpow.pop %v1506
        %v1508 = vmul.f32 %v1501, 1.442695
        %v1509 = vpow.pop %v1508
        %v1510 = vadd.f32 %v1503, 1.0
        %v1511 = vadd.f32 %v1505, 1.0
        %v1512 = vadd.f32 %v1507, 1.0
        %v1513 = vadd.f32 %v1509, 1.0
        %v1514 = vrcp.pop %v1510
        %v1515 = vmul.f32 1.0, %v1514
        %v1516 = vrcp.pop %v1511
        %v1517 = vmul.f32 1.0, %v1516
        %v1518 = vrcp.pop %v1512
        %v1519 = vmul.f32 1.0, %v1518
        %v1520 = vrcp.pop %v1513
        %v1521 = vmul.f32 1.0, %v1520
        %1522 = vset.pattern.permute.xlu0 1
        %1523 = vperm.xlu0 %1522, %v1484
        %v1524 = vpop.permute.xlu0 %1523
        %v1526 = vlaneseq
        %v1527 = vshrl.u32 %v1526, 7
        %v1528 = vsub.s32 0, %v1527
        %v1529 = vrot.slane %v1524, %v1528
        %v1530 = vadd.f32 %v1480, %v1529
        %v1531 = vadd.f32 %v1481, %v1529
        %v1532 = vadd.f32 %v1482, %v1529
        %v1533 = vadd.f32 %v1483, %v1529
        %v1534 = vxor.u32 %v1530, 2147483648
        %v1535 = vxor.u32 %v1531, 2147483648
        %v1536 = vxor.u32 %v1532, 2147483648
        %v1537 = vxor.u32 %v1533, 2147483648
        %v1538 = vmul.f32 %v1534, 1.442695
        %v1539 = vpow.pop %v1538
        %v1540 = vmul.f32 %v1535, 1.442695
        %v1541 = vpow.pop %v1540
        %v1542 = vmul.f32 %v1536, 1.442695
        %v1543 = vpow.pop %v1542
        %v1544 = vmul.f32 %v1537, 1.442695
        %v1545 = vpow.pop %v1544
        %v1546 = vadd.f32 %v1539, 1.0
        %v1547 = vadd.f32 %v1541, 1.0
        %v1548 = vadd.f32 %v1543, 1.0
        %v1549 = vadd.f32 %v1545, 1.0
        %v1550 = vrcp.pop %v1546
        %v1551 = vmul.f32 1.0, %v1550
        %v1552 = vrcp.pop %v1547
        %v1553 = vmul.f32 1.0, %v1552
        %v1554 = vrcp.pop %v1548
        %v1555 = vmul.f32 1.0, %v1554
        %v1556 = vrcp.pop %v1549
        %v1557 = vmul.f32 1.0, %v1556
        %v1558 = vlaneseq
        %v1559 = vshrl.u32 %v1558, 7
        %v1560 = vsub.s32 0, %v1559
        %v1561 = vrot.slane %v1515, %v1560
        %v1562 = vlaneseq
        %v1563 = vshrl.u32 %v1562, 7
        %v1564 = vsub.s32 0, %v1563
        %v1565 = vrot.slane %v1517, %v1564
        %v1566 = vlaneseq
        %v1567 = vshrl.u32 %v1566, 7
        %v1568 = vsub.s32 0, %v1567
        %v1569 = vrot.slane %v1519, %v1568
        %v1570 = vlaneseq
        %v1571 = vshrl.u32 %v1570, 7
        %v1572 = vsub.s32 0, %v1571
        %v1573 = vrot.slane %v1521, %v1572
        %v1574 = vmul.f32 %v801, %v1561
        %v1575 = vmul.f32 %v802, %v1565
        %v1576 = vmul.f32 %v803, %v1561
        %v1577 = vmul.f32 %v804, %v1565
        %v1578 = vmul.f32 %v805, %v1569
        %v1579 = vmul.f32 %v806, %v1573
        %v1580 = vmul.f32 %v807, %v1569
        %v1581 = vmul.f32 %v808, %v1573
        %1582 = vst [vmem:[%s427] sm:$0xff] %v1574
        %1583 = vst [vmem:[%s427 + $0x8] sm:$0xff] %v1575
        %1584 = vst [vmem:[%s427 + $0x10] sm:$0xff] %v1576
        %1585 = vst [vmem:[%s427 + $0x18] sm:$0xff] %v1577
        %1586 = vst [vmem:[%s427 + $0x20] sm:$0xff] %v1578
        %1587 = vst [vmem:[%s427 + $0x28] sm:$0xff] %v1579
        %1588 = vst [vmem:[%s427 + $0x30] sm:$0xff] %v1580
        %1589 = vst [vmem:[%s427 + $0x38] sm:$0xff] %v1581
        %v1590 = vlaneseq
        %v1591 = vshrl.u32 %v1590, 7
        %v1592 = vsub.s32 1, %v1591
        %v1593 = vrot.slane %v1551, %v1592
        %v1594 = vlaneseq
        %v1595 = vshrl.u32 %v1594, 7
        %v1596 = vsub.s32 1, %v1595
        %v1597 = vrot.slane %v1553, %v1596
        %v1598 = vlaneseq
        %v1599 = vshrl.u32 %v1598, 7
        %v1600 = vsub.s32 1, %v1599
        %v1601 = vrot.slane %v1555, %v1600
        %v1602 = vlaneseq
        %v1603 = vshrl.u32 %v1602, 7
        %v1604 = vsub.s32 1, %v1603
        %v1605 = vrot.slane %v1557, %v1604
        %v1606 = vmul.f32 %v829, %v1593
        %v1607 = vmul.f32 %v830, %v1597
        %v1608 = vmul.f32 %v831, %v1593
        %v1609 = vmul.f32 %v832, %v1597
        %v1610 = vmul.f32 %v833, %v1601
        %v1611 = vmul.f32 %v834, %v1605
        %v1612 = vmul.f32 %v835, %v1601
        %v1613 = vmul.f32 %v836, %v1605
        %1614 = vst [vmem:[%s434] sm:$0xff] %v1606
        %1615 = vst [vmem:[%s434 + $0x8] sm:$0xff] %v1607
        %1616 = vst [vmem:[%s434 + $0x10] sm:$0xff] %v1608
        %1617 = vst [vmem:[%s434 + $0x18] sm:$0xff] %v1609
        %1618 = vst [vmem:[%s434 + $0x20] sm:$0xff] %v1610
        %1619 = vst [vmem:[%s434 + $0x28] sm:$0xff] %v1611
        %1620 = vst [vmem:[%s434 + $0x30] sm:$0xff] %v1612
        %1621 = vst [vmem:[%s434 + $0x38] sm:$0xff] %v1613
        %s1622 = sand.u32 %s260, 1
        %s1623 = scalar_lea.sflag [#allocation4], %s1622
        %s1624 = sand.u32 %s260, 1
        %s1625 = smul.addr %s1624, 64
        %s1626 = scalar_lea.vmem [#allocation5], %s1625
        %s1627 = sand.u32 %s286, 1
        %s1628 = scalar_lea.sflag [#allocation7], %s1627
        %s1629 = sand.u32 %s286, 1
        %s1630 = smul.addr %s1629, 64
        %s1631 = scalar_lea.vmem [#allocation6], %s1630
        // Predicated region
        $region65: #{tpu_custom_call.1} parent=59 // pred_check
          %p1632 = pneg %p270
        $region66: #{tpu_custom_call.1} parent=59 // pred_check_branch
          %1634 = sbr.rel (%p1632) target = $region68
        $region67: #{tpu_custom_call.1} parent=59 // pred_region
          %s1635 = smul.u32 2, %s32
          %s1637 = ssub.s32 1024, 1024
          %1638 = vsyncadd %s1623, %s1637
          %s1639 = smul.addr %s1635, 4
          %s1640 = smul.addr %s1639, 128
          %s1641 = scalar_lea.hbm %s10, %s1640
          %s1642 = sshll.u32 %s1626, 4
          %s1643 = int_to_ptr.vmem [resolvable:$true] %s1642
          %1648 = dma.vmem_to_hbm [thread:$0]  %s1643, 1024, %s1641, %s1623, 256, 256, 16
        $region68: #{tpu_custom_call.1} parent=59 // pred_fallthru
          _
        // Predicated region
        $region69: #{tpu_custom_call.1} parent=59 // pred_check
          %p1649 = pneg %p296
        $region70: #{tpu_custom_call.1} parent=59 // pred_check_branch
          %1651 = sbr.rel (%p1649) target = $region72
        $region71: #{tpu_custom_call.1} parent=59 // pred_region
          %s1652 = smul.u32 2, %s32
          %s1654 = ssub.s32 1024, 1024
          %1655 = vsyncadd %s1628, %s1654
          %s1656 = smul.addr %s1652, 4
          %s1657 = smul.addr %s1656, 128
          %s1658 = scalar_lea.hbm %s11, %s1657
          %s1659 = sshll.u32 %s1631, 4
          %s1660 = int_to_ptr.vmem [resolvable:$true] %s1659
          %1665 = dma.vmem_to_hbm [thread:$0]  %s1660, 1024, %s1658, %s1628, 256, 256, 16
        $region72: #{tpu_custom_call.1} parent=59 // pred_fallthru
          _
      $region60: #{tpu_custom_call.1} parent=5 // pred_fallthru
        _
      %p1666 = scmp.le.s32.totalorder 2, %s27
      // Predicated region
      $region73: #{tpu_custom_call.1} parent=5 // pred_check
        %p1667 = pneg %p1666
      $region74: #{tpu_custom_call.1} parent=5 // pred_check_branch
        %1669 = sbr.rel (%p1667) target = $region76
      $region75: #{tpu_custom_call.1} parent=5 // pred_region
        %s1670 = ssub.s32 %s27, 2
        // Predicated region
        $region77: #{tpu_custom_call.1} parent=75 // pred_check
          %p1671 = pneg %p276
        $region78: #{tpu_custom_call.1} parent=75 // pred_check_branch
          %1673 = sbr.rel (%p1671) target = $region80
        $region79: #{tpu_custom_call.1} parent=75 // pred_region
          %s1674 = sand.u32 %s261, 1
          %s1675 = scalar_lea.sflag [#allocation4], %s1674
          %s1676 = sand.u32 %s261, 1
          %s1677 = smul.addr %s1676, 64
          %s1678 = scalar_lea.vmem [#allocation5], %s1677
          %1679 = dma.done %s1675, 1024
        $region80: #{tpu_custom_call.1} parent=75 // pred_fallthru
          _
        // Predicated region
        $region81: #{tpu_custom_call.1} parent=75 // pred_check
          %p1680 = pneg %p302
        $region82: #{tpu_custom_call.1} parent=75 // pred_check_branch
          %1682 = sbr.rel (%p1680) target = $region84
        $region83: #{tpu_custom_call.1} parent=75 // pred_region
          %s1683 = sand.u32 %s287, 1
          %s1684 = scalar_lea.sflag [#allocation7], %s1683
          %s1685 = sand.u32 %s287, 1
          %s1686 = smul.addr %s1685, 64
          %s1687 = scalar_lea.vmem [#allocation6], %s1686
          %1688 = dma.done %s1684, 1024
        $region84: #{tpu_custom_call.1} parent=75 // pred_fallthru
          _
      $region76: #{tpu_custom_call.1} parent=5 // pred_fallthru
        _
    $region6: #{tpu_custom_call.1} parent=1 // loop_footer
      %s31 = sadd.s32 1, %s27
    $region7: #{tpu_custom_call.1} parent=1 // loop_footer_branch
      %26 = sbr.rel target = $region3
    $region8: #{tpu_custom_call.1} parent=1 // loop_exit
      _
    %1689 = vsyncpa [#allocation3], 1
    %s1690 = scalar_lea.sflag [#allocation3], 1
    %1691 = vsyncpa %s1690, 1
    %1692 = vsyncpa [#allocation4], 1
    %s1693 = scalar_lea.sflag [#allocation4], 1
    %1694 = vsyncpa %s1693, 1
    %1695 = vsyncpa [#allocation7], 1
    %s1696 = scalar_lea.sflag [#allocation7], 1
    %1697 = vsyncpa %s1696, 1

</llo_original>
